<compile_context>
chip_gen: v7x
topology: tpu7x:2x2x1
jax: 0.10.0
libtpu: 0.0.40
codegen_flags: <defaults>
</compile_context>

<pallas_src>
import jax
import jax.numpy as jnp
from jax.experimental import pallas as pl
from jax.experimental.pallas import tpu as pltpu

# ----------------------------- small config ---------------------------------
B, S = 2, 8                 # batch, seq
NH, HD = 2, 64              # heads, head_dim
H = NH * HD                 # hidden = 128 (lane-dense)
QK = NH * HD                # width of each Q / K / V slab (== H here)
I = 256                     # MLP intermediate size (lane-dense)
L = 2                       # decoder layers
V = 128                     # vocab size
EPS = 1e-6
ROPE_THETA = 10000.0
HALF = HD // 2
BS = B * S


# ------------------------------- RoPE tables ---------------------------------
def make_rope(seq_len, head_dim, theta=ROPE_THETA):
    inv_freq = 1.0 / (theta ** (jnp.arange(0, head_dim, 2, dtype=jnp.float32) / head_dim))
    pos = jnp.arange(seq_len, dtype=jnp.float32)
    freqs = pos[:, None] * inv_freq[None, :]                 # (S, HD/2)
    emb = jnp.concatenate([freqs, freqs], axis=-1)           # (S, HD)
    return jnp.cos(emb), jnp.sin(emb)


# -------------------------- fused decoder-stack kernel ------------------------
def _decoder_stack_kernel(x_ref, wqkv_ref, wo_ref, wgu_ref, wd_ref,
                          cos_ref, sin_ref, bias_ref, fnorm_ref,
                          o_ref, attn_ref):
    l = pl.program_id(1)
    last = pl.num_programs(1) - 1

    # Layer 0: seed the VMEM-resident hidden-state carry from the embeddings.
    @pl.when(l == 0)
    def _():
        o_ref[...] = x_ref[...]

    x = o_ref[...]                                           # (S, H) f32 carry

    def rms(v):                                              # gain folded into weights
        return v * jax.lax.rsqrt(jnp.mean(v * v, axis=-1, keepdims=True) + EPS)

    # ---- attention: norm -> fused QKV -> RoPE -> causal SDPA -> Wo + residual
    h = rms(x)
    qkv = jnp.dot(h.astype(jnp.bfloat16), wqkv_ref[0],
                  preferred_element_type=jnp.float32)        # (S, 3*QK) f32

    cos = cos_ref[...]                                       # (S, QK) head-tiled
    sin = sin_ref[...]                                       # (S, QK) tiled, sign baked in

    def rope(t):                                             # one assembly per full slab
        parts = []
        for hh in range(NH):
            c = hh * HD
            parts.append(t[:, c + HALF:c + HD])
            parts.append(t[:, c:c + HALF])
        return t * cos + jnp.concatenate(parts, axis=-1) * sin

    q = rope(qkv[:, :QK]).astype(jnp.bfloat16)               # 1/sqrt(HD) folded into wq
    k = rope(qkv[:, QK:2 * QK]).astype(jnp.bfloat16)
    v = qkv[:, 2 * QK:].astype(jnp.bfloat16)
    bias = bias_ref[...]                                     # (S, S) additive 0 / -1e30

    for hh in range(NH):                                     # tiny static loop (NH = 2)
        c = hh * HD
        s = jax.lax.dot_general(q[:, c:c + HD], k[:, c:c + HD],
                                (((1,), (1,)), ((), ())),    # q @ k^T without a transpose op
                                preferred_element_type=jnp.float32)
        s = s + bias
        p = jnp.exp(s - jnp.max(s, axis=-1, keepdims=True))
        p = p / jnp.sum(p, axis=-1, keepdims=True)           # exact reciprocal
        attn_ref[:, c:c + HD] = jnp.dot(p.astype(jnp.bfloat16), v[:, c:c + HD],
                                        preferred_element_type=jnp.float32)

    x = x + jnp.dot(attn_ref[...].astype(jnp.bfloat16), wo_ref[0],
                    preferred_element_type=jnp.float32)      # fused residual

    # ---- MLP: norm -> fused gate|up -> SiLU -> down + residual
    gu = jnp.dot(rms(x).astype(jnp.bfloat16), wgu_ref[0],
                 preferred_element_type=jnp.float32)         # (S, 2*I)
    g = gu[:, :I]
    u = gu[:, I:]
    a = (g * jax.nn.sigmoid(g)) * u
    x = x + jnp.dot(a.astype(jnp.bfloat16), wd_ref[0],
                    preferred_element_type=jnp.float32)

    # ---- carry to next layer / final RMSNorm on the last layer step
    @pl.when(l < last)
    def _():
        o_ref[...] = x

    @pl.when(l == last)
    def _():
        o_ref[...] = rms(x) * fnorm_ref[...]


def decoder_stack(x2d, params):
    return pl.pallas_call(
        _decoder_stack_kernel,
        out_shape=jax.ShapeDtypeStruct((BS, H), jnp.float32),
        grid_spec=pltpu.PrefetchScalarGridSpec(
            num_scalar_prefetch=0,
            grid=(B, L),                                      # (batch "parallel", layer carry)
            in_specs=[
                pl.BlockSpec((S, H), lambda b, l: (b, 0)),                # x rows of batch b
                pl.BlockSpec((1, H, 3 * QK), lambda b, l: (l, 0, 0)),     # wqkv (bf16, folded)
                pl.BlockSpec((1, QK, H), lambda b, l: (l, 0, 0)),         # wo   (bf16)
                pl.BlockSpec((1, H, 2 * I), lambda b, l: (l, 0, 0)),      # w gate|up (bf16, folded)
                pl.BlockSpec((1, I, H), lambda b, l: (l, 0, 0)),          # wd   (bf16)
                pl.BlockSpec((S, QK), lambda b, l: (0, 0)),               # cos (head-tiled)
                pl.BlockSpec((S, QK), lambda b, l: (0, 0)),               # sin (signed, tiled)
                pl.BlockSpec((S, S), lambda b, l: (0, 0)),                # causal additive bias
                pl.BlockSpec((1, H), lambda b, l: (0, 0)),                # final-norm gain
            ],
            out_specs=pl.BlockSpec((S, H), lambda b, l: (b, 0)),          # resident carry
            scratch_shapes=[pltpu.VMEM((S, QK), jnp.float32)],            # head-output slab
        ),
        input_output_aliases={0: 0},   # embedding buffer reused as the output carry
        compiler_params=pltpu.CompilerParams(
            dimension_semantics=("parallel", "arbitrary"),
        ),
    )(x2d, params["wqkv"], params["wo"], params["wgu"], params["wd"],
      params["cos_t"], params["sin_t"], params["bias"], params["fnorm"])


# ----------------------------- model parameters ------------------------------
def init_params(key):
    def w(k, shape, scale=0.02):
        return scale * jax.random.normal(k, shape, dtype=jnp.float32)

    embed = w(jax.random.fold_in(key, 1000), (V, H))
    cos, sin = make_rope(S, HD)                               # (S, HD) standard tables

    # Kernel-side RoPE tables: head-tiled, rotate-half sign baked into sin.
    sin_signed = jnp.concatenate([-sin[:, :HALF], sin[:, HALF:]], axis=-1)
    cos_t = jnp.tile(cos, (1, NH))                            # (S, QK)
    sin_t = jnp.tile(sin_signed, (1, NH))                     # (S, QK)

    # Additive causal bias, built once (never rebuilt inside the kernel).
    r = jnp.arange(S)
    bias = jnp.where(r[None, :] <= r[:, None], 0.0, -1e30).astype(jnp.float32)

    scale = 1.0 / (HD ** 0.5)                                 # 1/8: power of two -> exact fold
    ln1 = jnp.ones((H,), jnp.float32)                         # RMSNorm gains (model init = 1)
    ln2 = jnp.ones((H,), jnp.float32)

    ref_layers = []
    wqkv_k, wo_k, wgu_k, wd_k = [], [], [], []
    for l in range(L):
        ks = jax.random.split(jax.random.fold_in(key, l), 7)
        wq, wk, wv = w(ks[0], (H, QK)), w(ks[1], (H, QK)), w(ks[2], (H, QK))
        wo = w(ks[3], (QK, H))
        wg, wu = w(ks[4], (H, I)), w(ks[5], (H, I))
        wd = w(ks[6], (I, H))

        ref_layers.append(dict(
            wq=wq.astype(jnp.bfloat16), wk=wk.astype(jnp.bfloat16),
            wv=wv.astype(jnp.bfloat16), wo=wo.astype(jnp.bfloat16),
            wg=wg.astype(jnp.bfloat16), wu=wu.astype(jnp.bfloat16),
            wd=wd.astype(jnp.bfloat16), ln1=ln1, ln2=ln2))

        # Fold RMSNorm gains (row-wise) + attention scale (wq) into the fused
        # kernel weights before the bf16 cast (exact here).
        wqkv_k.append(jnp.concatenate(
            [ln1[:, None] * wq * scale, ln1[:, None] * wk, ln1[:, None] * wv],
            axis=1).astype(jnp.bfloat16))
        wo_k.append(wo.astype(jnp.bfloat16))
        wgu_k.append((ln2[:, None] * jnp.concatenate([wg, wu], axis=1)).astype(jnp.bfloat16))
        wd_k.append(wd.astype(jnp.bfloat16))

    params = {
        "embed": embed,
        "fnorm": jnp.ones((1, H), jnp.float32),
        "wqkv": jnp.stack(wqkv_k),          # (L, H, 3*QK)  bf16
        "wo": jnp.stack(wo_k),              # (L, QK, H)    bf16
        "wgu": jnp.stack(wgu_k),            # (L, H, 2*I)   bf16
        "wd": jnp.stack(wd_k),              # (L, I, H)     bf16
        "cos_t": cos_t,
        "sin_t": sin_t,
        "bias": bias,
    }
    ref_params = {"embed": embed, "layers": ref_layers,
                  "fnorm": jnp.ones((H,), jnp.float32),
                  "cos": cos, "sin": sin, "scale": scale}
    return params, ref_params


# ------------------------------ decoder forward ------------------------------
@jax.jit
def deepseek_decoder_last_hidden_state(input_ids, params):
    # TODO(synk): token-embedding gather (dynamic row gather) is jnp.take glue
    #             outside the kernel.
    x = jnp.take(params["embed"], input_ids.reshape(-1), axis=0)  # (B*S, H) f32
    out = decoder_stack(x, params)                                # one pallas_call
    return out.reshape(B, S, H)                                   # == last_hidden_state


# --------------------------- pure-JAX reference -------------------------------
def _rms_ref(x, g):
    return x * jax.lax.rsqrt(jnp.mean(x * x, axis=-1, keepdims=True) + EPS) * g


def reference_forward(input_ids, ref_params):
    x = jnp.take(ref_params["embed"], input_ids.reshape(-1), axis=0).reshape(B, S, H)
    cos, sin, scale = ref_params["cos"], ref_params["sin"], ref_params["scale"]
    causal = jnp.tril(jnp.ones((S, S), dtype=bool))

    def rope(t):                                             # (S, HD) standard rotate-half
        rot = jnp.concatenate([-t[:, HALF:], t[:, :HALF]], axis=-1)
        return t * cos + rot * sin

    for layer in ref_params["layers"]:
        hN = _rms_ref(x, layer["ln1"]).astype(jnp.bfloat16)
        q = jnp.dot(hN, layer["wq"], preferred_element_type=jnp.float32)   # (B,S,QK)
        k = jnp.dot(hN, layer["wk"], preferred_element_type=jnp.float32)
        v = jnp.dot(hN, layer["wv"], preferred_element_type=jnp.float32)

        ctx_b = []
        for b in range(B):
            heads = []
            for hh in range(NH):
                c = hh * HD
                qh = rope(q[b, :, c:c + HD]).astype(jnp.bfloat16)
                kh = rope(k[b, :, c:c + HD]).astype(jnp.bfloat16)
                vh = v[b, :, c:c + HD].astype(jnp.bfloat16)
                s = jnp.dot(qh, kh.T, preferred_element_type=jnp.float32) * scale
                s = jnp.where(causal, s, -1e30)
                p = jnp.exp(s - jnp.max(s, axis=-1, keepdims=True))
                p = p / jnp.sum(p, axis=-1, keepdims=True)
                heads.append(jnp.dot(p.astype(jnp.bfloat16), vh,
                                     preferred_element_type=jnp.float32))
            ctx_b.append(jnp.concatenate(heads, axis=-1))
        ctx = jnp.stack(ctx_b, axis=0)                                     # (B,S,QK)
        x = x + jnp.dot(ctx.astype(jnp.bfloat16), layer["wo"],
                        preferred_element_type=jnp.float32)

        h2 = _rms_ref(x, layer["ln2"]).astype(jnp.bfloat16)
        g = jnp.dot(h2, layer["wg"], preferred_element_type=jnp.float32)
        u = jnp.dot(h2, layer["wu"], preferred_element_type=jnp.float32)
        a = (g * jax.nn.sigmoid(g)) * u
        x = x + jnp.dot(a.astype(jnp.bfloat16), layer["wd"],
                        preferred_element_type=jnp.float32)

    return _rms_ref(x, ref_params["fnorm"])                                # (B,S,H)


# ----------------------------------- main ------------------------------------
if __name__ == "__main__":
    key = jax.random.PRNGKey(0)
    params, ref_params = init_params(key)
    input_ids = jax.random.randint(jax.random.fold_in(key, 123), (B, S), 0, V,
                                   dtype=jnp.int32)

    out = deepseek_decoder_last_hidden_state(input_ids, params)
    out = jax.block_until_ready(out)

    assert out.shape == (B, S, H) and out.dtype == jnp.float32
    assert bool(jnp.all(jnp.isfinite(out)))

    ref = reference_forward(input_ids, ref_params)
    max_err = float(jnp.max(jnp.abs(out - ref)))
    # Exact softmax reciprocal + exact (unit-gain / power-of-two) weight folds:
    # kernel and reference should agree to well below this tolerance.
    assert max_err < 1e-2, f"max abs diff vs reference too large: {max_err}"

    print("KERNEL_OK")
</pallas_src>

<mosaic_0001>
module attributes {stable_mosaic.version = 11 : i64} {
  func.func @_decoder_stack_kernel(%arg0: i32, %arg1: i32, %arg2: memref<8x128xf32, #tpu.memory_space<vmem>>, %arg3: memref<1x128x384xbf16, #tpu.memory_space<vmem>>, %arg4: memref<1x128x128xbf16, #tpu.memory_space<vmem>>, %arg5: memref<1x128x512xbf16, #tpu.memory_space<vmem>>, %arg6: memref<1x256x128xbf16, #tpu.memory_space<vmem>>, %arg7: memref<8x128xf32, #tpu.memory_space<vmem>>, %arg8: memref<8x128xf32, #tpu.memory_space<vmem>>, %arg9: memref<8x8xf32, #tpu.memory_space<vmem>>, %arg10: memref<1x128xf32, #tpu.memory_space<vmem>>, %arg11: memref<8x128xf32, #tpu.memory_space<vmem>>, %arg12: memref<8x128xf32, #tpu.memory_space<vmem>>) attributes {dimension_semantics = [#tpu.dimension_semantics<parallel>, #tpu.dimension_semantics<arbitrary>], iteration_bounds = array<i64: 2, 2>, scalar_prefetch = 0 : i64, scratch_operands = 1 : i64, tpu.core_type = #tpu.core_type<tc>, window_params = [{transform_indices = @transform_0, window_bounds = array<i64: 8, 128>}, {transform_indices = @transform_1, window_bounds = array<i64: 1, 128, 384>}, {transform_indices = @transform_2, window_bounds = array<i64: 1, 128, 128>}, {transform_indices = @transform_3, window_bounds = array<i64: 1, 128, 512>}, {transform_indices = @transform_4, window_bounds = array<i64: 1, 256, 128>}, {pipeline_mode = #tpu.pipeline_mode<synchronous>, transform_indices = @transform_5, window_bounds = array<i64: 8, 128>}, {pipeline_mode = #tpu.pipeline_mode<synchronous>, transform_indices = @transform_6, window_bounds = array<i64: 8, 128>}, {pipeline_mode = #tpu.pipeline_mode<synchronous>, transform_indices = @transform_7, window_bounds = array<i64: 8, 8>}, {pipeline_mode = #tpu.pipeline_mode<synchronous>, transform_indices = @transform_8, window_bounds = array<i64: 1, 128>}, {transform_indices = @transform_9, window_bounds = array<i64: 8, 128>}]} {
    %c0_i32 = arith.constant 0 : i32
    %0 = arith.cmpi eq, %arg1, %c0_i32 : i32
    %1 = arith.extui %0 : i1 to i32
    %c0_i32_0 = arith.constant 0 : i32
    %2 = arith.cmpi ne, %1, %c0_i32_0 : i32
    scf.if %2 {
      %c0_46 = arith.constant 0 : index
      %c0_47 = arith.constant 0 : index
      %117 = vector.load %arg2[%c0_46, %c0_47] : memref<8x128xf32, #tpu.memory_space<vmem>>, vector<8x128xf32>
      %c0_48 = arith.constant 0 : index
      %c0_49 = arith.constant 0 : index
      %118 = vector.load %arg11[%c0_48, %c0_49] : memref<8x128xf32, #tpu.memory_space<vmem>>, vector<8x128xf32>
      tpu.vector_store %arg11[%c0_48, %c0_49], %117 {strides = array<i32>} : memref<8x128xf32, #tpu.memory_space<vmem>>, vector<8x128xf32>,
    } else {
    }
    %c0 = arith.constant 0 : index
    %c0_1 = arith.constant 0 : index
    %3 = vector.load %arg11[%c0, %c0_1] : memref<8x128xf32, #tpu.memory_space<vmem>>, vector<8x128xf32>
    %4 = arith.mulf %3, %3 : vector<8x128xf32>
    %cst = arith.constant dense<0.000000e+00> : vector<8xf32>
    %5 = vector.multi_reduction <add>, %4, %cst [1] : vector<8x128xf32> to vector<8xf32>
    %6 = vector.shape_cast %5 : vector<8xf32> to vector<8x1xf32>
    %cst_2 = arith.constant 1.280000e+02 : f32
    %7 = vector.broadcast %cst_2 : f32 to vector<8x1xf32>
    %8 = arith.divf %6, %7 : vector<8x1xf32>
    %cst_3 = arith.constant 9.99999997E-7 : f32
    %9 = vector.broadcast %cst_3 : f32 to vector<8x1xf32>
    %10 = arith.addf %8, %9 : vector<8x1xf32>
    %11 = math.rsqrt %10 : vector<8x1xf32>
    %12 = vector.broadcast %11 : vector<8x1xf32> to vector<8x128xf32>
    %13 = arith.mulf %3, %12 : vector<8x128xf32>
    %14 = arith.truncf %13 : vector<8x128xf32> to vector<8x128xbf16>
    %c0_4 = arith.constant 0 : index
    %c0_5 = arith.constant 0 : index
    %c0_6 = arith.constant 0 : index
    %15 = vector.load %arg3[%c0_4, %c0_5, %c0_6] : memref<1x128x384xbf16, #tpu.memory_space<vmem>>, vector<1x128x384xbf16>
    %16 = vector.shape_cast %15 : vector<1x128x384xbf16> to vector<128x384xbf16>
    %cst_7 = arith.constant dense<0.000000e+00> : vector<8x384xf32>
    %17 = tpu.matmul %14, %16, %cst_7 {dimension_numbers = #tpu.dot_dimension_numbers<[1], [0], [0], [1], [0, 0, 1, 1], [], []>} : vector<8x128xbf16>, vector<128x384xbf16>, vector<8x384xf32> -> vector<8x384xf32>
    %c0_8 = arith.constant 0 : index
    %c0_9 = arith.constant 0 : index
    %18 = vector.load %arg7[%c0_8, %c0_9] : memref<8x128xf32, #tpu.memory_space<vmem>>, vector<8x128xf32>
    %c0_10 = arith.constant 0 : index
    %c0_11 = arith.constant 0 : index
    %19 = vector.load %arg8[%c0_10, %c0_11] : memref<8x128xf32, #tpu.memory_space<vmem>>, vector<8x128xf32>
    %20 = vector.extract_strided_slice %17 {offsets = [0, 0], sizes = [8, 128], strides = [1, 1]} : vector<8x384xf32> to vector<8x128xf32>
    %21 = vector.extract_strided_slice %20 {offsets = [0, 32], sizes = [8, 32], strides = [1, 1]} : vector<8x128xf32> to vector<8x32xf32>
    %22 = vector.extract_strided_slice %20 {offsets = [0, 0], sizes = [8, 32], strides = [1, 1]} : vector<8x128xf32> to vector<8x32xf32>
    %23 = vector.extract_strided_slice %20 {offsets = [0, 96], sizes = [8, 32], strides = [1, 1]} : vector<8x128xf32> to vector<8x32xf32>
    %24 = vector.extract_strided_slice %20 {offsets = [0, 64], sizes = [8, 32], strides = [1, 1]} : vector<8x128xf32> to vector<8x32xf32>
    %25 = arith.mulf %20, %18 : vector<8x128xf32>
    %26 = tpu.concatenate %21, %22, %23, %24 in 1 : vector<8x32xf32>, vector<8x32xf32>, vector<8x32xf32>, vector<8x32xf32> -> vector<8x128xf32>
    %27 = arith.mulf %26, %19 : vector<8x128xf32>
    %28 = arith.addf %25, %27 : vector<8x128xf32>
    %29 = arith.truncf %28 : vector<8x128xf32> to vector<8x128xbf16>
    %30 = vector.extract_strided_slice %17 {offsets = [0, 128], sizes = [8, 128], strides = [1, 1]} : vector<8x384xf32> to vector<8x128xf32>
    %31 = vector.extract_strided_slice %30 {offsets = [0, 32], sizes = [8, 32], strides = [1, 1]} : vector<8x128xf32> to vector<8x32xf32>
    %32 = vector.extract_strided_slice %30 {offsets = [0, 0], sizes = [8, 32], strides = [1, 1]} : vector<8x128xf32> to vector<8x32xf32>
    %33 = vector.extract_strided_slice %30 {offsets = [0, 96], sizes = [8, 32], strides = [1, 1]} : vector<8x128xf32> to vector<8x32xf32>
    %34 = vector.extract_strided_slice %30 {offsets = [0, 64], sizes = [8, 32], strides = [1, 1]} : vector<8x128xf32> to vector<8x32xf32>
    %35 = arith.mulf %30, %18 : vector<8x128xf32>
    %36 = tpu.concatenate %31, %32, %33, %34 in 1 : vector<8x32xf32>, vector<8x32xf32>, vector<8x32xf32>, vector<8x32xf32> -> vector<8x128xf32>
    %37 = arith.mulf %36, %19 : vector<8x128xf32>
    %38 = arith.addf %35, %37 : vector<8x128xf32>
    %39 = arith.truncf %38 : vector<8x128xf32> to vector<8x128xbf16>
    %40 = vector.extract_strided_slice %17 {offsets = [0, 256], sizes = [8, 128], strides = [1, 1]} : vector<8x384xf32> to vector<8x128xf32>
    %41 = arith.truncf %40 : vector<8x128xf32> to vector<8x128xbf16>
    %c0_12 = arith.constant 0 : index
    %c0_13 = arith.constant 0 : index
    %42 = vector.load %arg9[%c0_12, %c0_13] : memref<8x8xf32, #tpu.memory_space<vmem>>, vector<8x8xf32>
    %43 = vector.extract_strided_slice %29 {offsets = [0, 0], sizes = [8, 64], strides = [1, 1]} : vector<8x128xbf16> to vector<8x64xbf16>
    %44 = vector.extract_strided_slice %39 {offsets = [0, 0], sizes = [8, 64], strides = [1, 1]} : vector<8x128xbf16> to vector<8x64xbf16>
    %cst_14 = arith.constant dense<0.000000e+00> : vector<8x8xf32>
    %45 = tpu.matmul %43, %44, %cst_14 {dimension_numbers = #tpu.dot_dimension_numbers<[1], [1], [0], [0], [0, 0, 1, 0], [], []>} : vector<8x64xbf16>, vector<8x64xbf16>, vector<8x8xf32> -> vector<8x8xf32>
    %46 = arith.addf %45, %42 : vector<8x8xf32>
    %cst_15 = arith.constant dense<0xFF800000> : vector<8xf32>
    %47 = vector.multi_reduction <maximumf>, %46, %cst_15 [1] : vector<8x8xf32> to vector<8xf32>
    %48 = vector.shape_cast %47 : vector<8xf32> to vector<8x1xf32>
    %49 = vector.broadcast %48 : vector<8x1xf32> to vector<8x8xf32>
    %50 = arith.subf %46, %49 : vector<8x8xf32>
    %51 = math.exp %50 : vector<8x8xf32>
    %cst_16 = arith.constant dense<0.000000e+00> : vector<8xf32>
    %52 = vector.multi_reduction <add>, %51, %cst_16 [1] : vector<8x8xf32> to vector<8xf32>
    %53 = vector.shape_cast %52 : vector<8xf32> to vector<8x1xf32>
    %54 = vector.broadcast %53 : vector<8x1xf32> to vector<8x8xf32>
    %55 = arith.divf %51, %54 : vector<8x8xf32>
    %56 = arith.truncf %55 : vector<8x8xf32> to vector<8x8xbf16>
    %57 = vector.extract_strided_slice %41 {offsets = [0, 0], sizes = [8, 64], strides = [1, 1]} : vector<8x128xbf16> to vector<8x64xbf16>
    %cst_17 = arith.constant dense<0.000000e+00> : vector<8x64xf32>
    %58 = tpu.matmul %56, %57, %cst_17 {dimension_numbers = #tpu.dot_dimension_numbers<[1], [0], [0], [1], [0, 0, 1, 1], [], []>} : vector<8x8xbf16>, vector<8x64xbf16>, vector<8x64xf32> -> vector<8x64xf32>
    %c0_18 = arith.constant 0 : index
    %c0_19 = arith.constant 0 : index
    %59 = vector.load %arg12[%c0_18, %c0_19] : memref<8x128xf32, #tpu.memory_space<vmem>>, vector<8x64xf32>
    tpu.vector_store %arg12[%c0_18, %c0_19], %58 {strides = array<i32>} : memref<8x128xf32, #tpu.memory_space<vmem>>, vector<8x64xf32>,
    %60 = vector.extract_strided_slice %29 {offsets = [0, 64], sizes = [8, 64], strides = [1, 1]} : vector<8x128xbf16> to vector<8x64xbf16>
    %61 = vector.extract_strided_slice %39 {offsets = [0, 64], sizes = [8, 64], strides = [1, 1]} : vector<8x128xbf16> to vector<8x64xbf16>
    %cst_20 = arith.constant dense<0.000000e+00> : vector<8x8xf32>
    %62 = tpu.matmul %60, %61, %cst_20 {dimension_numbers = #tpu.dot_dimension_numbers<[1], [1], [0], [0], [0, 0, 1, 0], [], []>} : vector<8x64xbf16>, vector<8x64xbf16>, vector<8x8xf32> -> vector<8x8xf32>
    %63 = arith.addf %62, %42 : vector<8x8xf32>
    %cst_21 = arith.constant dense<0xFF800000> : vector<8xf32>
    %64 = vector.multi_reduction <maximumf>, %63, %cst_21 [1] : vector<8x8xf32> to vector<8xf32>
    %65 = vector.shape_cast %64 : vector<8xf32> to vector<8x1xf32>
    %66 = vector.broadcast %65 : vector<8x1xf32> to vector<8x8xf32>
    %67 = arith.subf %63, %66 : vector<8x8xf32>
    %68 = math.exp %67 : vector<8x8xf32>
    %cst_22 = arith.constant dense<0.000000e+00> : vector<8xf32>
    %69 = vector.multi_reduction <add>, %68, %cst_22 [1] : vector<8x8xf32> to vector<8xf32>
    %70 = vector.shape_cast %69 : vector<8xf32> to vector<8x1xf32>
    %71 = vector.broadcast %70 : vector<8x1xf32> to vector<8x8xf32>
    %72 = arith.divf %68, %71 : vector<8x8xf32>
    %73 = arith.truncf %72 : vector<8x8xf32> to vector<8x8xbf16>
    %74 = vector.extract_strided_slice %41 {offsets = [0, 64], sizes = [8, 64], strides = [1, 1]} : vector<8x128xbf16> to vector<8x64xbf16>
    %cst_23 = arith.constant dense<0.000000e+00> : vector<8x64xf32>
    %75 = tpu.matmul %73, %74, %cst_23 {dimension_numbers = #tpu.dot_dimension_numbers<[1], [0], [0], [1], [0, 0, 1, 1], [], []>} : vector<8x8xbf16>, vector<8x64xbf16>, vector<8x64xf32> -> vector<8x64xf32>
    %c0_24 = arith.constant 0 : index
    %c64 = arith.constant 64 : index
    %76 = vector.load %arg12[%c0_24, %c64] : memref<8x128xf32, #tpu.memory_space<vmem>>, vector<8x64xf32>
    tpu.vector_store %arg12[%c0_24, %c64], %75 {strides = array<i32>} : memref<8x128xf32, #tpu.memory_space<vmem>>, vector<8x64xf32>,
    %c0_25 = arith.constant 0 : index
    %c0_26 = arith.constant 0 : index
    %77 = vector.load %arg12[%c0_25, %c0_26] : memref<8x128xf32, #tpu.memory_space<vmem>>, vector<8x128xf32>
    %78 = arith.truncf %77 : vector<8x128xf32> to vector<8x128xbf16>
    %c0_27 = arith.constant 0 : index
    %c0_28 = arith.constant 0 : index
    %c0_29 = arith.constant 0 : index
    %79 = vector.load %arg4[%c0_27, %c0_28, %c0_29] : memref<1x128x128xbf16, #tpu.memory_space<vmem>>, vector<1x128x128xbf16>
    %80 = vector.shape_cast %79 : vector<1x128x128xbf16> to vector<128x128xbf16>
    %cst_30 = arith.constant dense<0.000000e+00> : vector<8x128xf32>
    %81 = tpu.matmul %78, %80, %cst_30 {dimension_numbers = #tpu.dot_dimension_numbers<[1], [0], [0], [1], [0, 0, 1, 1], [], []>} : vector<8x128xbf16>, vector<128x128xbf16>, vector<8x128xf32> -> vector<8x128xf32>
    %82 = arith.addf %3, %81 : vector<8x128xf32>
    %83 = arith.mulf %82, %82 : vector<8x128xf32>
    %cst_31 = arith.constant dense<0.000000e+00> : vector<8xf32>
    %84 = vector.multi_reduction <add>, %83, %cst_31 [1] : vector<8x128xf32> to vector<8xf32>
    %85 = vector.shape_cast %84 : vector<8xf32> to vector<8x1xf32>
    %cst_32 = arith.constant 1.280000e+02 : f32
    %86 = vector.broadcast %cst_32 : f32 to vector<8x1xf32>
    %87 = arith.divf %85, %86 : vector<8x1xf32>
    %cst_33 = arith.constant 9.99999997E-7 : f32
    %88 = vector.broadcast %cst_33 : f32 to vector<8x1xf32>
    %89 = arith.addf %87, %88 : vector<8x1xf32>
    %90 = math.rsqrt %89 : vector<8x1xf32>
    %91 = vector.broadcast %90 : vector<8x1xf32> to vector<8x128xf32>
    %92 = arith.mulf %82, %91 : vector<8x128xf32>
    %93 = arith.truncf %92 : vector<8x128xf32> to vector<8x128xbf16>
    %c0_34 = arith.constant 0 : index
    %c0_35 = arith.constant 0 : index
    %c0_36 = arith.constant 0 : index
    %94 = vector.load %arg5[%c0_34, %c0_35, %c0_36] : memref<1x128x512xbf16, #tpu.memory_space<vmem>>, vector<1x128x512xbf16>
    %95 = vector.shape_cast %94 : vector<1x128x512xbf16> to vector<128x512xbf16>
    %cst_37 = arith.constant dense<0.000000e+00> : vector<8x512xf32>
    %96 = tpu.matmul %93, %95, %cst_37 {dimension_numbers = #tpu.dot_dimension_numbers<[1], [0], [0], [1], [0, 0, 1, 1], [], []>} : vector<8x128xbf16>, vector<128x512xbf16>, vector<8x512xf32> -> vector<8x512xf32>
    %97 = vector.extract_strided_slice %96 {offsets = [0, 0], sizes = [8, 256], strides = [1, 1]} : vector<8x512xf32> to vector<8x256xf32>
    %98 = vector.extract_strided_slice %96 {offsets = [0, 256], sizes = [8, 256], strides = [1, 1]} : vector<8x512xf32> to vector<8x256xf32>
    %99 = arith.negf %97 : vector<8x256xf32>
    %100 = math.exp %99 : vector<8x256xf32>
    %cst_38 = arith.constant 1.000000e+00 : f32
    %101 = vector.broadcast %cst_38 : f32 to vector<8x256xf32>
    %102 = arith.addf %101, %100 : vector<8x256xf32>
    %103 = arith.divf %101, %102 : vector<8x256xf32>
    %104 = arith.mulf %97, %103 : vector<8x256xf32>
    %105 = arith.mulf %104, %98 : vector<8x256xf32>
    %106 = arith.truncf %105 : vector<8x256xf32> to vector<8x256xbf16>
    %c0_39 = arith.constant 0 : index
    %c0_40 = arith.constant 0 : index
    %c0_41 = arith.constant 0 : index
    %107 = vector.load %arg6[%c0_39, %c0_40, %c0_41] : memref<1x256x128xbf16, #tpu.memory_space<vmem>>, vector<1x256x128xbf16>
    %108 = vector.shape_cast %107 : vector<1x256x128xbf16> to vector<256x128xbf16>
    %cst_42 = arith.constant dense<0.000000e+00> : vector<8x128xf32>
    %109 = tpu.matmul %106, %108, %cst_42 {dimension_numbers = #tpu.dot_dimension_numbers<[1], [0], [0], [1], [0, 0, 1, 1], [], []>} : vector<8x256xbf16>, vector<256x128xbf16>, vector<8x128xf32> -> vector<8x128xf32>
    %110 = arith.addf %82, %109 : vector<8x128xf32>
    %c1_i32 = arith.constant 1 : i32
    %111 = arith.cmpi slt, %arg1, %c1_i32 : i32
    %112 = arith.extui %111 : i1 to i32
    %c0_i32_43 = arith.constant 0 : i32
    %113 = arith.cmpi ne, %112, %c0_i32_43 : i32
    scf.if %113 {
      %c0_46 = arith.constant 0 : index
      %c0_47 = arith.constant 0 : index
      %117 = vector.load %arg11[%c0_46, %c0_47] : memref<8x128xf32, #tpu.memory_space<vmem>>, vector<8x128xf32>
      tpu.vector_store %arg11[%c0_46, %c0_47], %110 {strides = array<i32>} : memref<8x128xf32, #tpu.memory_space<vmem>>, vector<8x128xf32>,
    } else {
    }
    %c1_i32_44 = arith.constant 1 : i32
    %114 = arith.cmpi eq, %arg1, %c1_i32_44 : i32
    %115 = arith.extui %114 : i1 to i32
    %c0_i32_45 = arith.constant 0 : i32
    %116 = arith.cmpi ne, %115, %c0_i32_45 : i32
    scf.if %116 {
      %117 = arith.mulf %110, %110 : vector<8x128xf32>
      %cst_46 = arith.constant dense<0.000000e+00> : vector<8xf32>
      %118 = vector.multi_reduction <add>, %117, %cst_46 [1] : vector<8x128xf32> to vector<8xf32>
      %119 = vector.shape_cast %118 : vector<8xf32> to vector<8x1xf32>
      %cst_47 = arith.constant 1.280000e+02 : f32
      %120 = vector.broadcast %cst_47 : f32 to vector<8x1xf32>
      %121 = arith.divf %119, %120 : vector<8x1xf32>
      %cst_48 = arith.constant 9.99999997E-7 : f32
      %122 = vector.broadcast %cst_48 : f32 to vector<8x1xf32>
      %123 = arith.addf %121, %122 : vector<8x1xf32>
      %124 = math.rsqrt %123 : vector<8x1xf32>
      %125 = vector.broadcast %124 : vector<8x1xf32> to vector<8x128xf32>
      %126 = arith.mulf %110, %125 : vector<8x128xf32>
      %c0_49 = arith.constant 0 : index
      %c0_50 = arith.constant 0 : index
      %127 = vector.load %arg10[%c0_49, %c0_50] : memref<1x128xf32, #tpu.memory_space<vmem>>, vector<1x128xf32>
      %128 = vector.broadcast %127 : vector<1x128xf32> to vector<8x128xf32>
      %129 = arith.mulf %126, %128 : vector<8x128xf32>
      %c0_51 = arith.constant 0 : index
      %c0_52 = arith.constant 0 : index
      %130 = vector.load %arg11[%c0_51, %c0_52] : memref<8x128xf32, #tpu.memory_space<vmem>>, vector<8x128xf32>
      tpu.vector_store %arg11[%c0_51, %c0_52], %129 {strides = array<i32>} : memref<8x128xf32, #tpu.memory_space<vmem>>, vector<8x128xf32>,
    } else {
    }
    return
  }
  func.func @transform_0(%arg0: i32, %arg1: i32) -> (i32, i32) {
    %c0_i32 = arith.constant 0 : i32
    %c0_i32_0 = arith.constant 0 : i32
    return %arg0, %c0_i32 : i32, i32
  }
  func.func @transform_1(%arg0: i32, %arg1: i32) -> (i32, i32, i32) {
    %c0_i32 = arith.constant 0 : i32
    %c0_i32_0 = arith.constant 0 : i32
    %c0_i32_1 = arith.constant 0 : i32
    return %arg1, %c0_i32, %c0_i32_0 : i32, i32, i32
  }
  func.func @transform_2(%arg0: i32, %arg1: i32) -> (i32, i32, i32) {
    %c0_i32 = arith.constant 0 : i32
    %c0_i32_0 = arith.constant 0 : i32
    %c0_i32_1 = arith.constant 0 : i32
    return %arg1, %c0_i32, %c0_i32_0 : i32, i32, i32
  }
  func.func @transform_3(%arg0: i32, %arg1: i32) -> (i32, i32, i32) {
    %c0_i32 = arith.constant 0 : i32
    %c0_i32_0 = arith.constant 0 : i32
    %c0_i32_1 = arith.constant 0 : i32
    return %arg1, %c0_i32, %c0_i32_0 : i32, i32, i32
  }
  func.func @transform_4(%arg0: i32, %arg1: i32) -> (i32, i32, i32) {
    %c0_i32 = arith.constant 0 : i32
    %c0_i32_0 = arith.constant 0 : i32
    %c0_i32_1 = arith.constant 0 : i32
    return %arg1, %c0_i32, %c0_i32_0 : i32, i32, i32
  }
  func.func @transform_5(%arg0: i32, %arg1: i32) -> (i32, i32) {
    %c0_i32 = arith.constant 0 : i32
    %c0_i32_0 = arith.constant 0 : i32
    %c0_i32_1 = arith.constant 0 : i32
    return %c0_i32, %c0_i32_0 : i32, i32
  }
  func.func @transform_6(%arg0: i32, %arg1: i32) -> (i32, i32) {
    %c0_i32 = arith.constant 0 : i32
    %c0_i32_0 = arith.constant 0 : i32
    %c0_i32_1 = arith.constant 0 : i32
    return %c0_i32, %c0_i32_0 : i32, i32
  }
  func.func @transform_7(%arg0: i32, %arg1: i32) -> (i32, i32) {
    %c0_i32 = arith.constant 0 : i32
    %c0_i32_0 = arith.constant 0 : i32
    %c0_i32_1 = arith.constant 0 : i32
    return %c0_i32, %c0_i32_0 : i32, i32
  }
  func.func @transform_8(%arg0: i32, %arg1: i32) -> (i32, i32) {
    %c0_i32 = arith.constant 0 : i32
    %c0_i32_0 = arith.constant 0 : i32
    %c0_i32_1 = arith.constant 0 : i32
    return %c0_i32, %c0_i32_0 : i32, i32
  }
  func.func @transform_9(%arg0: i32, %arg1: i32) -> (i32, i32) {
    %c0_i32 = arith.constant 0 : i32
    %c0_i32_0 = arith.constant 0 : i32
    return %arg0, %c0_i32 : i32, i32
  }
}

</mosaic_0001>

<llo_original>
// kernel: deepseek_decoder_last_hidden_state.1
$region0: #{deepseek_decoder_last_hidden_state.1}
  #allocation0 [shape = 'u32[]', space=smem, size = 0x4, offset = 0x4, fixed_abs, tag = 'smem constant byte address 0x4 - core index']
  #allocation1 [shape = 'u32[144,128]{1,0:T(1,128)}', space=vmem, size = 0x12000, scoped, tag = 'internal scratch']
  #allocation2 [shape = 'f32[8,128]{1,0:T(8,128)}', space=vmem, size = 0x1000, scoped, tag = 'scratch operand']
  %s0 = inlined_call_operand.vmem [shape: f32[16,128], index: 0, kind: input, shape index: {}, may-alias: {0,9}]
  %s1 = inlined_call_operand.hbm [shape: bf16[2,128,384], index: 1, kind: input, shape index: {}]
  %s2 = inlined_call_operand.vmem [shape: bf16[2,128,128], index: 2, kind: input, shape index: {}]
  %s3 = inlined_call_operand.hbm [shape: bf16[2,128,512], index: 3, kind: input, shape index: {}]
  %s4 = inlined_call_operand.hbm [shape: bf16[2,256,128], index: 4, kind: input, shape index: {}]
  %s5 = inlined_call_operand.vmem [shape: f32[8,128], index: 5, kind: input, shape index: {}]
  %s6 = inlined_call_operand.vmem [shape: f32[8,128], index: 6, kind: input, shape index: {}]
  %s7 = inlined_call_operand.vmem [shape: f32[8,8], index: 7, kind: input, shape index: {}]
  %s8 = inlined_call_operand.vmem [shape: f32[1,128], index: 8, kind: input, shape index: {}]
  %s9 = inlined_call_operand.vmem [shape: f32[16,128], index: 9, kind: output, shape index: {}, may-alias: {0,9}]
  %s10 = sld [smem:[#allocation0]]
  $region93: #{deepseek_decoder_last_hidden_state.1} parent=0
    _
  %s12 = ssub.s32 1, %s10
  %s13 = scalar_select 0, %s12, %s10
  $region1: #{deepseek_decoder_last_hidden_state.1} parent=0
    #allocation3 [shape = 'u8[196608]{0}', space=vmem, size = 0x30000, scoped, tag = 'input window, operand 1']
    #allocation4 [shape = 's32[2]{0}', space=sflag, size = 0x8, scoped, tag = 'scoped memory for deepseek_decoder_last_hidden_state.1']
    #allocation5 [shape = 'u8[262144]{0}', space=vmem, size = 0x40000, scoped, tag = 'input window, operand 3']
    #allocation6 [shape = 's32[2]{0}', space=sflag, size = 0x8, scoped, tag = 'scoped memory for deepseek_decoder_last_hidden_state.1']
    #allocation7 [shape = 'u8[131072]{0}', space=vmem, size = 0x20000, scoped, tag = 'input window, operand 4']
    %14 = vsyncpa [#allocation4], 0
    %s15 = scalar_lea.sflag [#allocation4], 1
    %16 = vsyncpa %s15, 0
    %17 = vsyncpa [#allocation6], 0
    %s18 = scalar_lea.sflag [#allocation6], 1
    %19 = vsyncpa %s18, 0
    loop: start=0, step=1, limit=6
    $region2: #{deepseek_decoder_last_hidden_state.1} parent=1 // loop_pre_header
      _
    $region3: #{deepseek_decoder_last_hidden_state.1} parent=1 // loop_header
      %s21 = sphi 0, %s25
      %p22 = scmp.ge.s32.totalorder %s21, 6
      %s28 = sphi 0, %s40
      %s29 = sphi 0, %s36
      %s30 = sphi 0, %s28
      %s31 = sphi 0, %s29
      %s32 = sphi 0, %s30
      %s33 = sphi 0, %s31
      %s43 = sphi 0, %s45
      %s46 = sphi 0, %s43
      %s47 = sphi 0, %s46
      %s63 = sphi 0, %s47
      %s69 = sphi 0, %s71
      %s72 = sphi 0, %s69
      %s73 = sphi 0, %s72
      %s89 = sphi 0, %s73
      %s95 = sphi 0, %s97
      %s98 = sphi 0, %s95
      %s99 = sphi 0, %s98
      %s115 = sphi 0, %s99
      %s121 = sphi 0, %s123
      %s124 = sphi 0, %s121
      %s125 = sphi 0, %s124
      %s141 = sphi 0, %s125
      %s147 = sphi 0, %s149
      %s150 = sphi 0, %s147
      %s151 = sphi 0, %s150
      %s167 = sphi 0, %s151
      %s171 = sphi 0, %s171
      %s173 = sphi 0, %s171
      %s174 = sphi 0, %s173
      %s188 = sphi 0, %s174
      %s192 = sphi 0, %s192
      %s194 = sphi 0, %s192
      %s195 = sphi 0, %s194
      %s209 = sphi 0, %s195
      %s213 = sphi 0, %s213
      %s215 = sphi 0, %s213
      %s216 = sphi 0, %s215
      %s230 = sphi 0, %s216
      %s234 = sphi 0, %s234
      %s236 = sphi 0, %s234
      %s237 = sphi 0, %s236
      %s251 = sphi 0, %s237
      %s257 = sphi 0, %s259
      %s260 = sphi 0, %s257
      %s261 = sphi 0, %s260
      %s277 = sphi 0, %s261
    $region4: #{deepseek_decoder_last_hidden_state.1} parent=1 // loop_header_branch
      %24 = sbr.rel (%p22) target = $region8
    $region5: #{deepseek_decoder_last_hidden_state.1} parent=1 // loop_body
      %s26 = ssub.s32 %s21, 1
      %s27 = ssub.s32 %s21, 2
      %s34 = sadd.s32 1, %s29
      %p35 = scmp.ge.s32.totalorder %s34, 2
      %s36 = scalar_select %p35, 0, %s34
      %s37 = sadd.s32 1, %s28
      %s38 = scalar_select %p35, %s37, %s28
      %p39 = scmp.ge.s32.totalorder %s38, 2
      %s40 = scalar_select %p39, 0, %s38
      %s41 = ssub.s32 %s28, %s40
      %p42 = scmp.eq.s32.totalorder %s41, 0
      %s44 = sadd.s32 %s43, 1
      %s45 = scalar_select %p42, %s43, %s44
      %p48 = pneg %p42
      %p49 = scmp.eq.s32.totalorder %s21, 3
      %p50 = por %p48, %p49
      %p51 = scmp.ne.s32.totalorder %s43, %s46
      %p52 = scmp.eq.s32.totalorder %s21, 0
      %p53 = por %p51, %p52
      %p54 = scmp.ne.s32.totalorder %s43, %s46
      %p55 = scmp.eq.s32.totalorder %s26, 3
      %p56 = por %p54, %p55
      %p57 = scmp.ne.s32.totalorder %s46, %s47
      %p58 = scmp.eq.s32.totalorder %s26, 0
      %p59 = por %p57, %p58
      %p60 = scmp.ne.s32.totalorder %s46, %s47
      %p61 = scmp.eq.s32.totalorder %s27, 3
      %p62 = por %p60, %p61
      %p64 = scmp.ne.s32.totalorder %s47, %s63
      %p65 = scmp.eq.s32.totalorder %s27, 0
      %p66 = por %p64, %p65
      %s67 = ssub.s32 %s29, %s36
      %p68 = scmp.eq.s32.totalorder %s67, 0
      %s70 = sadd.s32 %s69, 1
      %s71 = scalar_select %p68, %s69, %s70
      %p74 = pneg %p68
      %p75 = scmp.eq.s32.totalorder %s21, 3
      %p76 = por %p74, %p75
      %p77 = scmp.ne.s32.totalorder %s69, %s72
      %p78 = scmp.eq.s32.totalorder %s21, 0
      %p79 = por %p77, %p78
      %p80 = scmp.ne.s32.totalorder %s69, %s72
      %p81 = scmp.eq.s32.totalorder %s26, 3
      %p82 = por %p80, %p81
      %p83 = scmp.ne.s32.totalorder %s72, %s73
      %p84 = scmp.eq.s32.totalorder %s26, 0
      %p85 = por %p83, %p84
      %p86 = scmp.ne.s32.totalorder %s72, %s73
      %p87 = scmp.eq.s32.totalorder %s27, 3
      %p88 = por %p86, %p87
      %p90 = scmp.ne.s32.totalorder %s73, %s89
      %p91 = scmp.eq.s32.totalorder %s27, 0
      %p92 = por %p90, %p91
      %s93 = ssub.s32 %s29, %s36
      %p94 = scmp.eq.s32.totalorder %s93, 0
      %s96 = sadd.s32 %s95, 1
      %s97 = scalar_select %p94, %s95, %s96
      %p100 = pneg %p94
      %p101 = scmp.eq.s32.totalorder %s21, 3
      %p102 = por %p100, %p101
      %p103 = scmp.ne.s32.totalorder %s95, %s98
      %p104 = scmp.eq.s32.totalorder %s21, 0
      %p105 = por %p103, %p104
      %p106 = scmp.ne.s32.totalorder %s95, %s98
      %p107 = scmp.eq.s32.totalorder %s26, 3
      %p108 = por %p106, %p107
      %p109 = scmp.ne.s32.totalorder %s98, %s99
      %p110 = scmp.eq.s32.totalorder %s26, 0
      %p111 = por %p109, %p110
      %p112 = scmp.ne.s32.totalorder %s98, %s99
      %p113 = scmp.eq.s32.totalorder %s27, 3
      %p114 = por %p112, %p113
      %p116 = scmp.ne.s32.totalorder %s99, %s115
      %p117 = scmp.eq.s32.totalorder %s27, 0
      %p118 = por %p116, %p117
      %s119 = ssub.s32 %s29, %s36
      %p120 = scmp.eq.s32.totalorder %s119, 0
      %s122 = sadd.s32 %s121, 1
      %s123 = scalar_select %p120, %s121, %s122
      %p126 = pneg %p120
      %p127 = scmp.eq.s32.totalorder %s21, 3
      %p128 = por %p126, %p127
      %p129 = scmp.ne.s32.totalorder %s121, %s124
      %p130 = scmp.eq.s32.totalorder %s21, 0
      %p131 = por %p129, %p130
      %p132 = scmp.ne.s32.totalorder %s121, %s124
      %p133 = scmp.eq.s32.totalorder %s26, 3
      %p134 = por %p132, %p133
      %p135 = scmp.ne.s32.totalorder %s124, %s125
      %p136 = scmp.eq.s32.totalorder %s26, 0
      %p137 = por %p135, %p136
      %p138 = scmp.ne.s32.totalorder %s124, %s125
      %p139 = scmp.eq.s32.totalorder %s27, 3
      %p140 = por %p138, %p139
      %p142 = scmp.ne.s32.totalorder %s125, %s141
      %p143 = scmp.eq.s32.totalorder %s27, 0
      %p144 = por %p142, %p143
      %s145 = ssub.s32 %s29, %s36
      %p146 = scmp.eq.s32.totalorder %s145, 0
      %s148 = sadd.s32 %s147, 1
      %s149 = scalar_select %p146, %s147, %s148
      %p152 = pneg %p146
      %p153 = scmp.eq.s32.totalorder %s21, 3
      %p154 = por %p152, %p153
      %p155 = scmp.ne.s32.totalorder %s147, %s150
      %p156 = scmp.eq.s32.totalorder %s21, 0
      %p157 = por %p155, %p156
      %p158 = scmp.ne.s32.totalorder %s147, %s150
      %p159 = scmp.eq.s32.totalorder %s26, 3
      %p160 = por %p158, %p159
      %p161 = scmp.ne.s32.totalorder %s150, %s151
      %p162 = scmp.eq.s32.totalorder %s26, 0
      %p163 = por %p161, %p162
      %p164 = scmp.ne.s32.totalorder %s150, %s151
      %p165 = scmp.eq.s32.totalorder %s27, 3
      %p166 = por %p164, %p165
      %p168 = scmp.ne.s32.totalorder %s151, %s167
      %p169 = scmp.eq.s32.totalorder %s27, 0
      %p170 = por %p168, %p169
      %s172 = sadd.s32 %s171, 1
      %p175 = scmp.eq.s32.totalorder %s21, 3
      %p176 = scmp.ne.s32.totalorder %s171, %s173
      %p177 = scmp.eq.s32.totalorder %s21, 0
      %p178 = por %p176, %p177
      %p179 = scmp.ne.s32.totalorder %s171, %s173
      %p180 = scmp.eq.s32.totalorder %s26, 3
      %p181 = por %p179, %p180
      %p182 = scmp.ne.s32.totalorder %s173, %s174
      %p183 = scmp.eq.s32.totalorder %s26, 0
      %p184 = por %p182, %p183
      %p185 = scmp.ne.s32.totalorder %s173, %s174
      %p186 = scmp.eq.s32.totalorder %s27, 3
      %p187 = por %p185, %p186
      %p189 = scmp.ne.s32.totalorder %s174, %s188
      %p190 = scmp.eq.s32.totalorder %s27, 0
      %p191 = por %p189, %p190
      %s193 = sadd.s32 %s192, 1
      %p196 = scmp.eq.s32.totalorder %s21, 3
      %p197 = scmp.ne.s32.totalorder %s192, %s194
      %p198 = scmp.eq.s32.totalorder %s21, 0
      %p199 = por %p197, %p198
      %p200 = scmp.ne.s32.totalorder %s192, %s194
      %p201 = scmp.eq.s32.totalorder %s26, 3
      %p202 = por %p200, %p201
      %p203 = scmp.ne.s32.totalorder %s194, %s195
      %p204 = scmp.eq.s32.totalorder %s26, 0
      %p205 = por %p203, %p204
      %p206 = scmp.ne.s32.totalorder %s194, %s195
      %p207 = scmp.eq.s32.totalorder %s27, 3
      %p208 = por %p206, %p207
      %p210 = scmp.ne.s32.totalorder %s195, %s209
      %p211 = scmp.eq.s32.totalorder %s27, 0
      %p212 = por %p210, %p211
      %s214 = sadd.s32 %s213, 1
      %p217 = scmp.eq.s32.totalorder %s21, 3
      %p218 = scmp.ne.s32.totalorder %s213, %s215
      %p219 = scmp.eq.s32.totalorder %s21, 0
      %p220 = por %p218, %p219
      %p221 = scmp.ne.s32.totalorder %s213, %s215
      %p222 = scmp.eq.s32.totalorder %s26, 3
      %p223 = por %p221, %p222
      %p224 = scmp.ne.s32.totalorder %s215, %s216
      %p225 = scmp.eq.s32.totalorder %s26, 0
      %p226 = por %p224, %p225
      %p227 = scmp.ne.s32.totalorder %s215, %s216
      %p228 = scmp.eq.s32.totalorder %s27, 3
      %p229 = por %p227, %p228
      %p231 = scmp.ne.s32.totalorder %s216, %s230
      %p232 = scmp.eq.s32.totalorder %s27, 0
      %p233 = por %p231, %p232
      %s235 = sadd.s32 %s234, 1
      %p238 = scmp.eq.s32.totalorder %s21, 3
      %p239 = scmp.ne.s32.totalorder %s234, %s236
      %p240 = scmp.eq.s32.totalorder %s21, 0
      %p241 = por %p239, %p240
      %p242 = scmp.ne.s32.totalorder %s234, %s236
      %p243 = scmp.eq.s32.totalorder %s26, 3
      %p244 = por %p242, %p243
      %p245 = scmp.ne.s32.totalorder %s236, %s237
      %p246 = scmp.eq.s32.totalorder %s26, 0
      %p247 = por %p245, %p246
      %p248 = scmp.ne.s32.totalorder %s236, %s237
      %p249 = scmp.eq.s32.totalorder %s27, 3
      %p250 = por %p248, %p249
      %p252 = scmp.ne.s32.totalorder %s237, %s251
      %p253 = scmp.eq.s32.totalorder %s27, 0
      %p254 = por %p252, %p253
      %s255 = ssub.s32 %s28, %s40
      %p256 = scmp.eq.s32.totalorder %s255, 0
      %s258 = sadd.s32 %s257, 1
      %s259 = scalar_select %p256, %s257, %s258
      %p262 = pneg %p256
      %p263 = scmp.eq.s32.totalorder %s21, 3
      %p264 = por %p262, %p263
      %p265 = scmp.ne.s32.totalorder %s257, %s260
      %p266 = scmp.eq.s32.totalorder %s21, 0
      %p267 = por %p265, %p266
      %p268 = scmp.ne.s32.totalorder %s257, %s260
      %p269 = scmp.eq.s32.totalorder %s26, 3
      %p270 = por %p268, %p269
      %p271 = scmp.ne.s32.totalorder %s260, %s261
      %p272 = scmp.eq.s32.totalorder %s26, 0
      %p273 = por %p271, %p272
      %p274 = scmp.ne.s32.totalorder %s260, %s261
      %p275 = scmp.eq.s32.totalorder %s27, 3
      %p276 = por %p274, %p275
      %p278 = scmp.ne.s32.totalorder %s261, %s277
      %p279 = scmp.eq.s32.totalorder %s27, 0
      %p280 = por %p278, %p279
      %p281 = scmp.le.s32.totalorder 1, %s21
      %p282 = scmp.lt.s32.totalorder %s21, 5
      %p283 = pnand %p281, %p282
      %p284 = pneg %p283
      // Predicated region
      $region9: #{deepseek_decoder_last_hidden_state.1} parent=5 // pred_check
        _
      $region10: #{deepseek_decoder_last_hidden_state.1} parent=5 // pred_check_branch
        %286 = sbr.rel (%p283) target = $region12
      $region11: #{deepseek_decoder_last_hidden_state.1} parent=5 // pred_region
        %s287 = ssub.s32 %s21, 1
        // Predicated region
        $region13: #{deepseek_decoder_last_hidden_state.1} parent=11 // pred_check
          %p288 = pneg %p184
        $region14: #{deepseek_decoder_last_hidden_state.1} parent=11 // pred_check_branch
          %290 = sbr.rel (%p288) target = $region16
        $region15: #{deepseek_decoder_last_hidden_state.1} parent=11 // pred_region
          _
        $region16: #{deepseek_decoder_last_hidden_state.1} parent=11 // pred_fallthru
          _
        // Predicated region
        $region17: #{deepseek_decoder_last_hidden_state.1} parent=11 // pred_check
          %p291 = pneg %p205
        $region18: #{deepseek_decoder_last_hidden_state.1} parent=11 // pred_check_branch
          %293 = sbr.rel (%p291) target = $region20
        $region19: #{deepseek_decoder_last_hidden_state.1} parent=11 // pred_region
          _
        $region20: #{deepseek_decoder_last_hidden_state.1} parent=11 // pred_fallthru
          _
        // Predicated region
        $region21: #{deepseek_decoder_last_hidden_state.1} parent=11 // pred_check
          %p294 = pneg %p226
        $region22: #{deepseek_decoder_last_hidden_state.1} parent=11 // pred_check_branch
          %296 = sbr.rel (%p294) target = $region24
        $region23: #{deepseek_decoder_last_hidden_state.1} parent=11 // pred_region
          _
        $region24: #{deepseek_decoder_last_hidden_state.1} parent=11 // pred_fallthru
          _
        // Predicated region
        $region25: #{deepseek_decoder_last_hidden_state.1} parent=11 // pred_check
          %p297 = pneg %p247
        $region26: #{deepseek_decoder_last_hidden_state.1} parent=11 // pred_check_branch
          %299 = sbr.rel (%p297) target = $region28
        $region27: #{deepseek_decoder_last_hidden_state.1} parent=11 // pred_region
          _
        $region28: #{deepseek_decoder_last_hidden_state.1} parent=11 // pred_fallthru
          _
      $region12: #{deepseek_decoder_last_hidden_state.1} parent=5 // pred_fallthru
        _
      %p300 = scmp.lt.s32.totalorder %s21, 4
      // Predicated region
      $region29: #{deepseek_decoder_last_hidden_state.1} parent=5 // pred_check
        %p301 = pneg %p300
      $region30: #{deepseek_decoder_last_hidden_state.1} parent=5 // pred_check_branch
        %303 = sbr.rel (%p301) target = $region32
      $region31: #{deepseek_decoder_last_hidden_state.1} parent=5 // pred_region
        // Predicated region
        $region33: #{deepseek_decoder_last_hidden_state.1} parent=31 // pred_check
          %p304 = pneg %p53
        $region34: #{deepseek_decoder_last_hidden_state.1} parent=31 // pred_check_branch
          %306 = sbr.rel (%p304) target = $region36
        $region35: #{deepseek_decoder_last_hidden_state.1} parent=31 // pred_region
          %p307 = scmp.lt.s32.totalorder %s28, 1
          %s308 = scalar_select %p307, %s28, 1
          %s309 = smul.addr %s308, 8
          %s310 = scalar_lea.vmem %s0, %s309
        $region36: #{deepseek_decoder_last_hidden_state.1} parent=31 // pred_fallthru
          _
        // Predicated region
        $region37: #{deepseek_decoder_last_hidden_state.1} parent=31 // pred_check
          %p311 = pneg %p79
        $region38: #{deepseek_decoder_last_hidden_state.1} parent=31 // pred_check_branch
          %313 = sbr.rel (%p311) target = $region40
        $region39: #{deepseek_decoder_last_hidden_state.1} parent=31 // pred_region
          %s314 = sand.u32 %s69, 1
          %s315 = scalar_lea.sflag [#allocation4], %s314
          %s316 = sand.u32 %s69, 1
          %s317 = smul.addr %s316, 192
          %s318 = scalar_lea.vmem [#allocation3], %s317
          %s320 = ssub.s32 3072, 3072
          %321 = vsyncadd %s315, %s320
          %s322 = smul.addr %s29, 48
          %s323 = smul.addr %s322, 64
          %s324 = scalar_lea.hbm %s1, %s323
          %s325 = sshll.u32 %s318, 4
          %s326 = int_to_ptr.vmem [resolvable:$true] %s325
          %331 = dma.hbm_to_vmem [thread:$0]  %s324, 3072, %s326, %s315, 192, 192, 12
        $region40: #{deepseek_decoder_last_hidden_state.1} parent=31 // pred_fallthru
          _
        // Predicated region
        $region41: #{deepseek_decoder_last_hidden_state.1} parent=31 // pred_check
          %p332 = pneg %p105
        $region42: #{deepseek_decoder_last_hidden_state.1} parent=31 // pred_check_branch
          %334 = sbr.rel (%p332) target = $region44
        $region43: #{deepseek_decoder_last_hidden_state.1} parent=31 // pred_region
          %p335 = scmp.lt.s32.totalorder %s29, 1
          %s336 = scalar_select %p335, %s29, 1
          %s337 = smul.addr %s336, 16
          %s338 = smul.addr %s337, 4
          %s339 = scalar_lea.vmem %s2, %s338
        $region44: #{deepseek_decoder_last_hidden_state.1} parent=31 // pred_fallthru
          _
        // Predicated region
        $region45: #{deepseek_decoder_last_hidden_state.1} parent=31 // pred_check
          %p340 = pneg %p131
        $region46: #{deepseek_decoder_last_hidden_state.1} parent=31 // pred_check_branch
          %342 = sbr.rel (%p340) target = $region48
        $region47: #{deepseek_decoder_last_hidden_state.1} parent=31 // pred_region
          %s343 = sand.u32 %s21, 1
          %s344 = scalar_lea.sflag [#allocation6], %s343
          %s345 = sand.u32 %s121, 1
          %s346 = smul.addr %s345, 256
          %s347 = scalar_lea.vmem [#allocation5], %s346
          %s349 = ssub.s32 4096, 4096
          %350 = vsyncadd %s344, %s349
          %s351 = smul.addr %s29, 64
          %s352 = smul.addr %s351, 64
          %s353 = scalar_lea.hbm %s3, %s352
          %s354 = sshll.u32 %s347, 4
          %s355 = int_to_ptr.vmem [resolvable:$true] %s354
          %360 = dma.hbm_to_vmem [thread:$0]  %s353, 4096, %s355, %s344, 256, 256, 16
        $region48: #{deepseek_decoder_last_hidden_state.1} parent=31 // pred_fallthru
          _
        // Predicated region
        $region49: #{deepseek_decoder_last_hidden_state.1} parent=31 // pred_check
          %p361 = pneg %p157
        $region50: #{deepseek_decoder_last_hidden_state.1} parent=31 // pred_check_branch
          %363 = sbr.rel (%p361) target = $region52
        $region51: #{deepseek_decoder_last_hidden_state.1} parent=31 // pred_region
          %s364 = sand.u32 %s21, 1
          %s365 = scalar_lea.sflag [#allocation6], %s364
          %s366 = sand.u32 %s147, 1
          %s367 = smul.addr %s366, 128
          %s368 = scalar_lea.vmem [#allocation7], %s367
          %s370 = ssub.s32 2048, 2048
          %371 = vsyncadd %s365, %s370
          %s372 = smul.addr %s29, 32
          %s373 = smul.addr %s372, 64
          %s374 = scalar_lea.hbm %s4, %s373
          %s375 = sshll.u32 %s368, 4
          %s376 = int_to_ptr.vmem [resolvable:$true] %s375
          %381 = dma.hbm_to_vmem [thread:$0]  %s374, 2048, %s376, %s365, 64, 64, 4
        $region52: #{deepseek_decoder_last_hidden_state.1} parent=31 // pred_fallthru
          _
      $region32: #{deepseek_decoder_last_hidden_state.1} parent=5 // pred_fallthru
        _
      %p382 = scmp.le.s32.totalorder 1, %s21
      %p383 = scmp.lt.s32.totalorder %s21, 5
      %p384 = pnand %p382, %p383
      %p385 = pneg %p384
      // Predicated region
      $region53: #{deepseek_decoder_last_hidden_state.1} parent=5 // pred_check
        _
      $region54: #{deepseek_decoder_last_hidden_state.1} parent=5 // pred_check_branch
        %387 = sbr.rel (%p384) target = $region56
      $region55: #{deepseek_decoder_last_hidden_state.1} parent=5 // pred_region
        %s388 = ssub.s32 %s21, 1
        %s389 = sand.u32 %s72, 1
        %s390 = scalar_lea.sflag [#allocation4], %s389
        %s391 = sand.u32 %s72, 1
        %s392 = smul.addr %s391, 192
        %s393 = scalar_lea.vmem [#allocation3], %s392
        // Predicated region
        $region57: #{deepseek_decoder_last_hidden_state.1} parent=55 // pred_check
          %p394 = pneg %p85
        $region58: #{deepseek_decoder_last_hidden_state.1} parent=55 // pred_check_branch
          %396 = sbr.rel (%p394) target = $region60
        $region59: #{deepseek_decoder_last_hidden_state.1} parent=55 // pred_region
          %397 = dma.done %s390, 3072
        $region60: #{deepseek_decoder_last_hidden_state.1} parent=55 // pred_fallthru
          _
        %s398 = sand.u32 %s26, 1
        %s399 = scalar_lea.sflag [#allocation6], %s398
        %s400 = sand.u32 %s124, 1
        %s401 = smul.addr %s400, 256
        %s402 = scalar_lea.vmem [#allocation5], %s401
        // Predicated region
        $region61: #{deepseek_decoder_last_hidden_state.1} parent=55 // pred_check
          %p403 = pneg %p137
        $region62: #{deepseek_decoder_last_hidden_state.1} parent=55 // pred_check_branch
          %405 = sbr.rel (%p403) target = $region64
        $region63: #{deepseek_decoder_last_hidden_state.1} parent=55 // pred_region
          %406 = dma.done %s399, 4096
        $region64: #{deepseek_decoder_last_hidden_state.1} parent=55 // pred_fallthru
          _
        %s407 = sand.u32 %s26, 1
        %s408 = scalar_lea.sflag [#allocation6], %s407
        %s409 = sand.u32 %s150, 1
        %s410 = smul.addr %s409, 128
        %s411 = scalar_lea.vmem [#allocation7], %s410
        // Predicated region
        $region65: #{deepseek_decoder_last_hidden_state.1} parent=55 // pred_check
          %p412 = pneg %p163
        $region66: #{deepseek_decoder_last_hidden_state.1} parent=55 // pred_check_branch
          %414 = sbr.rel (%p412) target = $region68
        $region67: #{deepseek_decoder_last_hidden_state.1} parent=55 // pred_region
          %415 = dma.done %s408, 2048
        $region68: #{deepseek_decoder_last_hidden_state.1} parent=55 // pred_fallthru
          _
        %p416 = scmp.lt.s32.totalorder %s30, 1
        %s417 = scalar_select %p416, %s30, 1
        %s418 = smul.addr %s417, 8
        %s419 = scalar_lea.vmem %s0, %s418
        %p420 = pneg %p59
        %p421 = pneg %p56
        %s422 = sand.u32 %s72, 1
        %s423 = scalar_lea.sflag [#allocation4], %s422
        %s424 = sand.u32 %s72, 1
        %s425 = smul.addr %s424, 192
        %s426 = scalar_lea.vmem [#allocation3], %s425
        %p427 = pneg %p85
        %p428 = pneg %p82
        %p429 = scmp.lt.s32.totalorder %s31, 1
        %s430 = scalar_select %p429, %s31, 1
        %s431 = smul.addr %s430, 16
        %s432 = smul.addr %s431, 4
        %s433 = scalar_lea.vmem %s2, %s432
        %p434 = pneg %p111
        %p435 = pneg %p108
        %s436 = sand.u32 %s26, 1
        %s437 = scalar_lea.sflag [#allocation6], %s436
        %s438 = sand.u32 %s124, 1
        %s439 = smul.addr %s438, 256
        %s440 = scalar_lea.vmem [#allocation5], %s439
        %p441 = pneg %p137
        %p442 = pneg %p134
        %s443 = sand.u32 %s26, 1
        %s444 = scalar_lea.sflag [#allocation6], %s443
        %s445 = sand.u32 %s150, 1
        %s446 = smul.addr %s445, 128
        %s447 = scalar_lea.vmem [#allocation7], %s446
        %p448 = pneg %p163
        %p449 = pneg %p160
        %p450 = pneg %p184
        %p451 = pneg %p181
        %p452 = pneg %p205
        %p453 = pneg %p202
        %p454 = pneg %p226
        %p455 = pneg %p223
        %p456 = pneg %p247
        %p457 = pneg %p244
        %p458 = pneg %p273
        %p459 = pneg %p270
        %p460 = scmp.lt.s32.totalorder %s30, 1
        %s461 = scalar_select %p460, %s30, 1
        %s462 = smul.addr %s461, 8
        %s463 = scalar_lea.vmem %s9, %s462
        %p464 = scmp.lt.s32.totalorder %s30, 1
        %s465 = scalar_select %p464, %s30, 1
        %s466 = smul.addr %s465, 8
        %s467 = scalar_lea.vmem %s0, %s466
        %p468 = scmp.lt.s32.totalorder %s31, 1
        %s469 = scalar_select %p468, %s31, 1
        %s470 = smul.addr %s469, 16
        %s471 = smul.addr %s470, 4
        %s472 = scalar_lea.vmem %s2, %s471
        %p473 = scmp.lt.s32.totalorder %s30, 1
        %s474 = scalar_select %p473, %s30, 1
        %s475 = smul.addr %s474, 8
        %s476 = scalar_lea.vmem %s9, %s475
        %p478 = scmp.eq.s32.totalorder %s31, 0
        // Predicated region
        $region69: #{deepseek_decoder_last_hidden_state.1} parent=55 // pred_check
          %p479 = pneg %p478
        $region70: #{deepseek_decoder_last_hidden_state.1} parent=55 // pred_check_branch
          %481 = sbr.rel (%p479) target = $region72
        $region71: #{deepseek_decoder_last_hidden_state.1} parent=55 // pred_region
          %v482 = vld [vmem:[%s467] sm:$0xff]
          %483 = vst [vmem:[%s476] sm:$0xff] %v482
        $region72: #{deepseek_decoder_last_hidden_state.1} parent=55 // pred_fallthru
          _
        %v484 = vld [vmem:[%s476] sm:$0xff]
        %v485 = vmul.f32 %v484, %v484
        %486 = vadd.xlane.f32.xlu0 %v485
        %v487 = vpop.xlane.xlu0 %486
        %v488 = vrcp.pop 128.0
        %v489 = vmul.f32 %v487, %v488
        %v490 = vadd.f32 %v489, 1e-06
        %v491 = vrsqrt.pop %v490
        %v492 = vmul.f32 %v484, %v491
        %v493 = vpack.c.bf16 %v492, %v492
        %v494 = vld [vmem:[%s393] sm:$0xff]
        %v495 = vld [vmem:[%s393 + $0x8] sm:$0xf]
        %v496 = vld [vmem:[%s393 + $0xc] sm:$0xff]
        %v497 = vld [vmem:[%s393 + $0x14] sm:$0xf]
        %v498 = vld [vmem:[%s393 + $0x18] sm:$0xff]
        %v499 = vld [vmem:[%s393 + $0x20] sm:$0xf]
        %v500 = vld [vmem:[%s393 + $0x24] sm:$0xff]
        %v501 = vld [vmem:[%s393 + $0x2c] sm:$0xf]
        %v502 = vld [vmem:[%s393 + $0x30] sm:$0xff]
        %v503 = vld [vmem:[%s393 + $0x38] sm:$0xf]
        %v504 = vld [vmem:[%s393 + $0x3c] sm:$0xff]
        %v505 = vld [vmem:[%s393 + $0x44] sm:$0xf]
        %v506 = vld [vmem:[%s393 + $0x48] sm:$0xff]
        %v507 = vld [vmem:[%s393 + $0x50] sm:$0xf]
        %v508 = vld [vmem:[%s393 + $0x54] sm:$0xff]
        %v509 = vld [vmem:[%s393 + $0x5c] sm:$0xf]
        %v510 = vld [vmem:[%s393 + $0x60] sm:$0xff]
        %v511 = vld [vmem:[%s393 + $0x68] sm:$0xf]
        %v512 = vld [vmem:[%s393 + $0x6c] sm:$0xff]
        %v513 = vld [vmem:[%s393 + $0x74] sm:$0xf]
        %v514 = vld [vmem:[%s393 + $0x78] sm:$0xff]
        %v515 = vld [vmem:[%s393 + $0x80] sm:$0xf]
        %v516 = vld [vmem:[%s393 + $0x84] sm:$0xff]
        %v517 = vld [vmem:[%s393 + $0x8c] sm:$0xf]
        %v518 = vld [vmem:[%s393 + $0x90] sm:$0xff]
        %v519 = vld [vmem:[%s393 + $0x98] sm:$0xf]
        %v520 = vld [vmem:[%s393 + $0x9c] sm:$0xff]
        %v521 = vld [vmem:[%s393 + $0xa4] sm:$0xf]
        %v522 = vld [vmem:[%s393 + $0xa8] sm:$0xff]
        %v523 = vld [vmem:[%s393 + $0xb0] sm:$0xf]
        %v524 = vld [vmem:[%s393 + $0xb4] sm:$0xff]
        %v525 = vld [vmem:[%s393 + $0xbc] sm:$0xf]
        %v558 = vunpack.c.l.b16 %v494
        %v559 = vunpack.c.h.b16 %v494
        %v560 = vunpack.c.l.b16 %v495
        %v561 = vunpack.c.l.b16 %v496
        %v562 = vunpack.c.h.b16 %v496
        %v563 = vunpack.c.l.b16 %v497
        %v564 = vunpack.c.l.b16 %v498
        %v565 = vunpack.c.h.b16 %v498
        %v566 = vunpack.c.l.b16 %v499
        %v567 = vunpack.c.l.b16 %v500
        %v568 = vunpack.c.h.b16 %v500
        %v569 = vunpack.c.l.b16 %v501
        %v570 = vunpack.c.l.b16 %v502
        %v571 = vunpack.c.h.b16 %v502
        %v572 = vunpack.c.l.b16 %v503
        %v573 = vunpack.c.l.b16 %v504
        %v574 = vunpack.c.h.b16 %v504
        %v575 = vunpack.c.l.b16 %v505
        %v576 = vunpack.c.l.b16 %v506
        %v577 = vunpack.c.h.b16 %v506
        %v578 = vunpack.c.l.b16 %v507
        %v579 = vunpack.c.l.b16 %v508
        %v580 = vunpack.c.h.b16 %v508
        %v581 = vunpack.c.l.b16 %v509
        %v582 = vunpack.c.l.b16 %v510
        %v583 = vunpack.c.h.b16 %v510
        %v584 = vunpack.c.l.b16 %v511
        %v585 = vunpack.c.l.b16 %v512
        %v586 = vunpack.c.h.b16 %v512
        %v587 = vunpack.c.l.b16 %v513
        %v588 = vunpack.c.l.b16 %v514
        %v589 = vunpack.c.h.b16 %v514
        %v590 = vunpack.c.l.b16 %v515
        %v591 = vunpack.c.l.b16 %v516
        %v592 = vunpack.c.h.b16 %v516
        %v593 = vunpack.c.l.b16 %v517
        %v594 = vunpack.c.l.b16 %v518
        %v595 = vunpack.c.h.b16 %v518
        %v596 = vunpack.c.l.b16 %v519
        %v597 = vunpack.c.l.b16 %v520
        %v598 = vunpack.c.h.b16 %v520
        %v599 = vunpack.c.l.b16 %v521
        %v600 = vunpack.c.l.b16 %v522
        %v601 = vunpack.c.h.b16 %v522
        %v602 = vunpack.c.l.b16 %v523
        %v603 = vunpack.c.l.b16 %v524
        %v604 = vunpack.c.h.b16 %v524
        %v605 = vunpack.c.l.b16 %v525
        %v606 = vpack.c.b16 %v561, %v558
        %v607 = vpack.c.b16 %v562, %v559
        %v608 = vpack.c.b16 %v563, %v560
        %v609 = vpack.c.b16 %v567, %v564
        %v610 = vpack.c.b16 %v568, %v565
        %v611 = vpack.c.b16 %v569, %v566
        %v612 = vpack.c.b16 %v573, %v570
        %v613 = vpack.c.b16 %v574, %v571
        %v614 = vpack.c.b16 %v575, %v572
        %v615 = vpack.c.b16 %v579, %v576
        %v616 = vpack.c.b16 %v580, %v577
        %v617 = vpack.c.b16 %v581, %v578
        %v618 = vpack.c.b16 %v585, %v582
        %v619 = vpack.c.b16 %v586, %v583
        %v620 = vpack.c.b16 %v587, %v584
        %v621 = vpack.c.b16 %v591, %v588
        %v622 = vpack.c.b16 %v592, %v589
        %v623 = vpack.c.b16 %v593, %v590
        %v624 = vpack.c.b16 %v597, %v594
        %v625 = vpack.c.b16 %v598, %v595
        %v626 = vpack.c.b16 %v599, %v596
        %v627 = vpack.c.b16 %v603, %v600
        %v628 = vpack.c.b16 %v604, %v601
        %v629 = vpack.c.b16 %v605, %v602
        %654 = vmatprep.subr.bf16.mxu0 %v607
        %655 = vmatpush1.bf16.msra.mxu0 %v606
        %656 = vmatprep.subr.bf16.mxu0 %v610
        %657 = vmatpush1.bf16.msra.mxu0 %v609
        %658 = vmatprep.subr.bf16.mxu0 %v613
        %659 = vmatpush1.bf16.msra.mxu0 %v612
        %660 = vmatprep.subr.bf16.mxu0 %v616
        %661 = vmatpush1.bf16.msra.mxu0 %v615
        %662 = vmatprep.subr.bf16.mxu0 %v619
        %663 = vmatpush1.bf16.msra.mxu0 %v618
        %664 = vmatprep.subr.bf16.mxu0 %v622
        %665 = vmatpush1.bf16.msra.mxu0 %v621
        %666 = vmatprep.subr.bf16.mxu0 %v625
        %667 = vmatpush1.bf16.msra.mxu0 %v624
        %668 = vmatprep.subr.bf16.mxu0 %v628
        %669 = vmatpush1.bf16.msra.mxu0 %v627
        %670 = vmatprep.subr.bf16.mxu0 0
        %671 = vmatpush1.bf16.msra.mxu0 0
        %672 = vmatprep.subr.bf16.mxu0 0
        %673 = vmatpush1.bf16.msra.mxu0 0
        %674 = vmatprep.subr.bf16.mxu0 0
        %675 = vmatpush1.bf16.msra.mxu0 0
        %676 = vmatprep.subr.bf16.mxu0 0
        %677 = vmatpush1.bf16.msra.mxu0 0
        %678 = vmatprep.subr.bf16.mxu0 0
        %679 = vmatpush1.bf16.msra.mxu0 0
        %680 = vmatprep.subr.bf16.mxu0 0
        %681 = vmatpush1.bf16.msra.mxu0 0
        %682 = vmatprep.subr.bf16.mxu0 0
        %683 = vmatpush1.bf16.msra.mxu0 0
        %684 = vmatprep.subr.bf16.mxu0 0
        %685 = vmatpush1.bf16.msra.mxu0 0
        %686 = vmatprep.mubr.bf16.mxu0 0
        %687 = vmatmul.mubr.bf16.gmra.mrb[0].mxu0 %v493
        %v688 = vpop.f32.mrb[0].mxu0
        %v689 = vadd.f32 0.0, %v688
        %v690 = vpop.f32.mrb[0].mxu0
        %v691 = vadd.f32 0.0, %v690
        %v692 = vpop.f32.mrb[0].mxu0
        %v693 = vpop.f32.mrb[0].mxu0
        %694 = vdwg.mxu0
        %695 = vmatprep.subr.bf16.mxu0 0
        %696 = vmatpush1.bf16.msra.mxu0 %v608
        %697 = vmatprep.subr.bf16.mxu0 0
        %698 = vmatpush1.bf16.msra.mxu0 %v611
        %699 = vmatprep.subr.bf16.mxu0 0
        %700 = vmatpush1.bf16.msra.mxu0 %v614
        %701 = vmatprep.subr.bf16.mxu0 0
        %702 = vmatpush1.bf16.msra.mxu0 %v617
        %703 = vmatprep.subr.bf16.mxu0 0
        %704 = vmatpush1.bf16.msra.mxu0 %v620
        %705 = vmatprep.subr.bf16.mxu0 0
        %706 = vmatpush1.bf16.msra.mxu0 %v623
        %707 = vmatprep.subr.bf16.mxu0 0
        %708 = vmatpush1.bf16.msra.mxu0 %v626
        %709 = vmatprep.subr.bf16.mxu0 0
        %710 = vmatpush1.bf16.msra.mxu0 %v629
        %711 = vmatprep.subr.bf16.mxu0 0
        %712 = vmatpush1.bf16.msra.mxu0 0
        %713 = vmatprep.subr.bf16.mxu0 0
        %714 = vmatpush1.bf16.msra.mxu0 0
        %715 = vmatprep.subr.bf16.mxu0 0
        %716 = vmatpush1.bf16.msra.mxu0 0
        %717 = vmatprep.subr.bf16.mxu0 0
        %718 = vmatpush1.bf16.msra.mxu0 0
        %719 = vmatprep.subr.bf16.mxu0 0
        %720 = vmatpush1.bf16.msra.mxu0 0
        %721 = vmatprep.subr.bf16.mxu0 0
        %722 = vmatpush1.bf16.msra.mxu0 0
        %723 = vmatprep.subr.bf16.mxu0 0
        %724 = vmatpush1.bf16.msra.mxu0 0
        %725 = vmatprep.subr.bf16.mxu0 0
        %726 = vmatpush1.bf16.msra.mxu0 0
        %727 = vmatprep.mubr.bf16.mxu0 0
        %728 = vmatmul.mubr.bf16.gmra.mrb[0].mxu0 %v493
        %v729 = vpop.f32.mrb[0].mxu0
        %v730 = vadd.f32 0.0, %v729
        %v731 = vpop.f32.mrb[0].mxu0
        %v732 = vpop.f32.mrb[0].mxu0
        %v733 = vpop.f32.mrb[0].mxu0
        %734 = vdwg.mxu0
        %v735 = vld [vmem:[%s5] sm:$0xff]
        %v736 = vld [vmem:[%s6] sm:$0xff]
        %v737 = vmul.f32 %v689, %v735
        %739 = vrot.lane.b32.xlu0 %v689, 96
        %v740 = vpop.permute.xlu0 %739
        %742 = vrot.lane.b32.xlu0 %v689, 32
        %v743 = vpop.permute.xlu0 %742
        %vm745 = vcmask 261120
        %v746 = vsel %vm745, %v740, %v743
        %vm747 = vcmask 523264
        %v748 = vsel %vm747, %v746, %v740
        %vm749 = vcmask 785408
        %v750 = vsel %vm749, %v748, %v743
        %v751 = vmul.f32 %v750, %v736
        %v752 = vadd.f32 %v737, %v751
        %v753 = vpack.c.bf16 %v752, %v752
        %v754 = vmul.f32 %v691, %v735
        %756 = vrot.lane.b32.xlu0 %v691, 96
        %v757 = vpop.permute.xlu0 %756
        %759 = vrot.lane.b32.xlu0 %v691, 32
        %v760 = vpop.permute.xlu0 %759
        %v762 = vsel %vm745, %v757, %v760
        %v763 = vsel %vm747, %v762, %v757
        %v764 = vsel %vm749, %v763, %v760
        %v765 = vmul.f32 %v764, %v736
        %v766 = vadd.f32 %v754, %v765
        %v767 = vpack.c.bf16 %v766, %v766
        %v768 = vpack.c.bf16 %v730, %v730
        %v769 = vld [vmem:[%s7] sm:$0xff]
        %v771 = vsel %vm747, %v753, 0
        %v774 = vsel %vm747, %v767, 0
        %776 = vmatprep.subr.bf16.mxu0 0
        %777 = vmatpush1.bf16.xpose.msra.mxu0 %v774
        %778 = vmatprep.subr.bf16.mxu0 0
        %779 = vmatpush1.bf16.xpose.msra.mxu0 0
        %780 = vmatprep.subr.bf16.mxu0 0
        %781 = vmatpush1.bf16.xpose.msra.mxu0 0
        %782 = vmatprep.subr.bf16.mxu0 0
        %783 = vmatpush1.bf16.xpose.msra.mxu0 0
        %784 = vmatprep.subr.bf16.mxu0 0
        %785 = vmatpush1.bf16.xpose.msra.mxu0 0
        %786 = vmatprep.subr.bf16.mxu0 0
        %787 = vmatpush1.bf16.xpose.msra.mxu0 0
        %788 = vmatprep.subr.bf16.mxu0 0
        %789 = vmatpush1.bf16.xpose.msra.mxu0 0
        %790 = vmatprep.subr.bf16.mxu0 0
        %791 = vmatpush1.bf16.xpose.msra.mxu0 0
        %792 = vmatprep.subr.bf16.mxu0 0
        %793 = vmatpush1.bf16.xpose.msra.mxu0 0
        %794 = vmatprep.subr.bf16.mxu0 0
        %795 = vmatpush1.bf16.xpose.msra.mxu0 0
        %796 = vmatprep.subr.bf16.mxu0 0
        %797 = vmatpush1.bf16.xpose.msra.mxu0 0
        %798 = vmatprep.subr.bf16.mxu0 0
        %799 = vmatpush1.bf16.xpose.msra.mxu0 0
        %800 = vmatprep.subr.bf16.mxu0 0
        %801 = vmatpush1.bf16.xpose.msra.mxu0 0
        %802 = vmatprep.subr.bf16.mxu0 0
        %803 = vmatpush1.bf16.xpose.msra.mxu0 0
        %804 = vmatprep.subr.bf16.mxu0 0
        %805 = vmatpush1.bf16.xpose.msra.mxu0 0
        %806 = vmatprep.subr.bf16.mxu0 0
        %807 = vmatpush1.bf16.xpose.msra.mxu0 0
        %808 = vmatprep.mubr.bf16.mxu0 0
        %809 = vmatmul.mubr.bf16.gmra.mrb[0].mxu0 %v771
        %v810 = vpop.f32.mrb[0].mxu0
        %v811 = vadd.f32 %v769, %v810
        %v812 = vpop.f32.mrb[0].mxu0
        %v813 = vpop.f32.mrb[0].mxu0
        %v814 = vpop.f32.mrb[0].mxu0
        %815 = vdwg.mxu0
        %vm816 = vcmask 64512
        %v817 = vsel %vm816, %v811, -inf
        %818 = vmax.xlane.f32.xlu0 %v817
        %v819 = vpop.xlane.xlu0 %818
        %v820 = vsub.f32 %v811, %v819
        %v821 = vmul.f32 %v820, 1.442695
        %v822 = vpow.pop %v821
        %v823 = vsel %vm816, %v822, 0.0
        %824 = vadd.xlane.f32.xlu0 %v823
        %v825 = vpop.xlane.xlu0 %824
        %v826 = vrcp.pop %v825
        %v827 = vmul.f32 %v822, %v826
        %v828 = vpack.c.bf16 %v827, %v827
        %v830 = vsel %vm816, %v828, 0
        %vm832 = vcmask 1043456
        %v834 = vsel %vm832, %v768, 0
        %836 = vmatprep.subr.bf16.mxu0 0
        %837 = vmatpush1.bf16.msra.mxu0 %v834
        %838 = vmatprep.subr.bf16.mxu0 0
        %839 = vmatpush1.bf16.msra.mxu0 0
        %840 = vmatprep.subr.bf16.mxu0 0
        %841 = vmatpush1.bf16.msra.mxu0 0
        %842 = vmatprep.subr.bf16.mxu0 0
        %843 = vmatpush1.bf16.msra.mxu0 0
        %844 = vmatprep.subr.bf16.mxu0 0
        %845 = vmatpush1.bf16.msra.mxu0 0
        %846 = vmatprep.subr.bf16.mxu0 0
        %847 = vmatpush1.bf16.msra.mxu0 0
        %848 = vmatprep.subr.bf16.mxu0 0
        %849 = vmatpush1.bf16.msra.mxu0 0
        %850 = vmatprep.subr.bf16.mxu0 0
        %851 = vmatpush1.bf16.msra.mxu0 0
        %852 = vmatprep.subr.bf16.mxu0 0
        %853 = vmatpush1.bf16.msra.mxu0 0
        %854 = vmatprep.subr.bf16.mxu0 0
        %855 = vmatpush1.bf16.msra.mxu0 0
        %856 = vmatprep.subr.bf16.mxu0 0
        %857 = vmatpush1.bf16.msra.mxu0 0
        %858 = vmatprep.subr.bf16.mxu0 0
        %859 = vmatpush1.bf16.msra.mxu0 0
        %860 = vmatprep.subr.bf16.mxu0 0
        %861 = vmatpush1.bf16.msra.mxu0 0
        %862 = vmatprep.subr.bf16.mxu0 0
        %863 = vmatpush1.bf16.msra.mxu0 0
        %864 = vmatprep.subr.bf16.mxu0 0
        %865 = vmatpush1.bf16.msra.mxu0 0
        %866 = vmatprep.subr.bf16.mxu0 0
        %867 = vmatpush1.bf16.msra.mxu0 0
        %868 = vmatprep.mubr.bf16.mxu0 0
        %869 = vmatmul.mubr.bf16.gmra.mrb[0].mxu0 %v830
        %v870 = vpop.f32.mrb[0].mxu0
        %v871 = vadd.f32 0.0, %v870
        %v872 = vpop.f32.mrb[0].mxu0
        %v873 = vpop.f32.mrb[0].mxu0
        %v874 = vpop.f32.mrb[0].mxu0
        %875 = vdwg.mxu0
        %876 = vst.msk [vmem:[#allocation2] sm:$0xff] %vm747, %v871
        %878 = vrot.lane.b32.xlu0 %v753, 64
        %v879 = vpop.permute.xlu0 %878
        %881 = vrot.lane.b32.xlu0 %v767, 64
        %v882 = vpop.permute.xlu0 %881
        %v884 = vsel %vm747, %v879, 0
        %v887 = vsel %vm747, %v882, 0
        %889 = vmatprep.subr.bf16.mxu0 0
        %890 = vmatpush1.bf16.xpose.msra.mxu0 %v887
        %891 = vmatprep.subr.bf16.mxu0 0
        %892 = vmatpush1.bf16.xpose.msra.mxu0 0
        %893 = vmatprep.subr.bf16.mxu0 0
        %894 = vmatpush1.bf16.xpose.msra.mxu0 0
        %895 = vmatprep.subr.bf16.mxu0 0
        %896 = vmatpush1.bf16.xpose.msra.mxu0 0
        %897 = vmatprep.subr.bf16.mxu0 0
        %898 = vmatpush1.bf16.xpose.msra.mxu0 0
        %899 = vmatprep.subr.bf16.mxu0 0
        %900 = vmatpush1.bf16.xpose.msra.mxu0 0
        %901 = vmatprep.subr.bf16.mxu0 0
        %902 = vmatpush1.bf16.xpose.msra.mxu0 0
        %903 = vmatprep.subr.bf16.mxu0 0
        %904 = vmatpush1.bf16.xpose.msra.mxu0 0
        %905 = vmatprep.subr.bf16.mxu0 0
        %906 = vmatpush1.bf16.xpose.msra.mxu0 0
        %907 = vmatprep.subr.bf16.mxu0 0
        %908 = vmatpush1.bf16.xpose.msra.mxu0 0
        %909 = vmatprep.subr.bf16.mxu0 0
        %910 = vmatpush1.bf16.xpose.msra.mxu0 0
        %911 = vmatprep.subr.bf16.mxu0 0
        %912 = vmatpush1.bf16.xpose.msra.mxu0 0
        %913 = vmatprep.subr.bf16.mxu0 0
        %914 = vmatpush1.bf16.xpose.msra.mxu0 0
        %915 = vmatprep.subr.bf16.mxu0 0
        %916 = vmatpush1.bf16.xpose.msra.mxu0 0
        %917 = vmatprep.subr.bf16.mxu0 0
        %918 = vmatpush1.bf16.xpose.msra.mxu0 0
        %919 = vmatprep.subr.bf16.mxu0 0
        %920 = vmatpush1.bf16.xpose.msra.mxu0 0
        %921 = vmatprep.mubr.bf16.mxu0 0
        %922 = vmatmul.mubr.bf16.gmra.mrb[0].mxu0 %v884
        %v923 = vpop.f32.mrb[0].mxu0
        %v924 = vadd.f32 %v769, %v923
        %v925 = vpop.f32.mrb[0].mxu0
        %v926 = vpop.f32.mrb[0].mxu0
        %v927 = vpop.f32.mrb[0].mxu0
        %928 = vdwg.mxu0
        %v929 = vsel %vm816, %v924, -inf
        %930 = vmax.xlane.f32.xlu0 %v929
        %v931 = vpop.xlane.xlu0 %930
        %v932 = vsub.f32 %v924, %v931
        %v933 = vmul.f32 %v932, 1.442695
        %v934 = vpow.pop %v933
        %v935 = vsel %vm816, %v934, 0.0
        %936 = vadd.xlane.f32.xlu0 %v935
        %v937 = vpop.xlane.xlu0 %936
        %v938 = vrcp.pop %v937
        %v939 = vmul.f32 %v934, %v938
        %v940 = vpack.c.bf16 %v939, %v939
        %942 = vrot.lane.b32.xlu0 %v768, 64
        %v943 = vpop.permute.xlu0 %942
        %v945 = vsel %vm816, %v940, 0
        %v948 = vsel %vm832, %v943, 0
        %950 = vmatprep.subr.bf16.mxu0 0
        %951 = vmatpush1.bf16.msra.mxu0 %v948
        %952 = vmatprep.subr.bf16.mxu0 0
        %953 = vmatpush1.bf16.msra.mxu0 0
        %954 = vmatprep.subr.bf16.mxu0 0
        %955 = vmatpush1.bf16.msra.mxu0 0
        %956 = vmatprep.subr.bf16.mxu0 0
        %957 = vmatpush1.bf16.msra.mxu0 0
        %958 = vmatprep.subr.bf16.mxu0 0
        %959 = vmatpush1.bf16.msra.mxu0 0
        %960 = vmatprep.subr.bf16.mxu0 0
        %961 = vmatpush1.bf16.msra.mxu0 0
        %962 = vmatprep.subr.bf16.mxu0 0
        %963 = vmatpush1.bf16.msra.mxu0 0
        %964 = vmatprep.subr.bf16.mxu0 0
        %965 = vmatpush1.bf16.msra.mxu0 0
        %966 = vmatprep.subr.bf16.mxu0 0
        %967 = vmatpush1.bf16.msra.mxu0 0
        %968 = vmatprep.subr.bf16.mxu0 0
        %969 = vmatpush1.bf16.msra.mxu0 0
        %970 = vmatprep.subr.bf16.mxu0 0
        %971 = vmatpush1.bf16.msra.mxu0 0
        %972 = vmatprep.subr.bf16.mxu0 0
        %973 = vmatpush1.bf16.msra.mxu0 0
        %974 = vmatprep.subr.bf16.mxu0 0
        %975 = vmatpush1.bf16.msra.mxu0 0
        %976 = vmatprep.subr.bf16.mxu0 0
        %977 = vmatpush1.bf16.msra.mxu0 0
        %978 = vmatprep.subr.bf16.mxu0 0
        %979 = vmatpush1.bf16.msra.mxu0 0
        %980 = vmatprep.subr.bf16.mxu0 0
        %981 = vmatpush1.bf16.msra.mxu0 0
        %982 = vmatprep.mubr.bf16.mxu0 0
        %983 = vmatmul.mubr.bf16.gmra.mrb[0].mxu0 %v945
        %v984 = vpop.f32.mrb[0].mxu0
        %v985 = vadd.f32 0.0, %v984
        %v986 = vpop.f32.mrb[0].mxu0
        %v987 = vpop.f32.mrb[0].mxu0
        %v988 = vpop.f32.mrb[0].mxu0
        %989 = vdwg.mxu0
        %991 = vrot.lane.b32.xlu0 %v985, 64
        %v992 = vpop.permute.xlu0 %991
        %vm994 = vcmask 1048064
        %995 = vst.msk [vmem:[#allocation2] sm:$0xff] %vm994, %v992
        %v996 = vld [vmem:[#allocation2] sm:$0xff]
        %v997 = vpack.c.bf16 %v996, %v996
        %v998 = vld [vmem:[%s472] sm:$0xf]
        %v999 = vld [vmem:[%s472 + $0x4] sm:$0xf]
        %v1000 = vld [vmem:[%s472 + $0x8] sm:$0xf]
        %v1001 = vld [vmem:[%s472 + $0xc] sm:$0xf]
        %v1002 = vld [vmem:[%s472 + $0x10] sm:$0xf]
        %v1003 = vld [vmem:[%s472 + $0x14] sm:$0xf]
        %v1004 = vld [vmem:[%s472 + $0x18] sm:$0xf]
        %v1005 = vld [vmem:[%s472 + $0x1c] sm:$0xf]
        %v1006 = vld [vmem:[%s472 + $0x20] sm:$0xf]
        %v1007 = vld [vmem:[%s472 + $0x24] sm:$0xf]
        %v1008 = vld [vmem:[%s472 + $0x28] sm:$0xf]
        %v1009 = vld [vmem:[%s472 + $0x2c] sm:$0xf]
        %v1010 = vld [vmem:[%s472 + $0x30] sm:$0xf]
        %v1011 = vld [vmem:[%s472 + $0x34] sm:$0xf]
        %v1012 = vld [vmem:[%s472 + $0x38] sm:$0xf]
        %v1013 = vld [vmem:[%s472 + $0x3c] sm:$0xf]
        %v1030 = vunpack.c.l.b16 %v998
        %v1031 = vunpack.c.l.b16 %v999
        %v1032 = vunpack.c.l.b16 %v1000
        %v1033 = vunpack.c.l.b16 %v1001
        %v1034 = vunpack.c.l.b16 %v1002
        %v1035 = vunpack.c.l.b16 %v1003
        %v1036 = vunpack.c.l.b16 %v1004
        %v1037 = vunpack.c.l.b16 %v1005
        %v1038 = vunpack.c.l.b16 %v1006
        %v1039 = vunpack.c.l.b16 %v1007
        %v1040 = vunpack.c.l.b16 %v1008
        %v1041 = vunpack.c.l.b16 %v1009
        %v1042 = vunpack.c.l.b16 %v1010
        %v1043 = vunpack.c.l.b16 %v1011
        %v1044 = vunpack.c.l.b16 %v1012
        %v1045 = vunpack.c.l.b16 %v1013
        %v1046 = vpack.c.b16 %v1031, %v1030
        %v1047 = vpack.c.b16 %v1033, %v1032
        %v1048 = vpack.c.b16 %v1035, %v1034
        %v1049 = vpack.c.b16 %v1037, %v1036
        %v1050 = vpack.c.b16 %v1039, %v1038
        %v1051 = vpack.c.b16 %v1041, %v1040
        %v1052 = vpack.c.b16 %v1043, %v1042
        %v1053 = vpack.c.b16 %v1045, %v1044
        %1062 = vmatprep.subr.bf16.mxu0 0
        %1063 = vmatpush1.bf16.msra.mxu0 %v1046
        %1064 = vmatprep.subr.bf16.mxu0 0
        %1065 = vmatpush1.bf16.msra.mxu0 %v1047
        %1066 = vmatprep.subr.bf16.mxu0 0
        %1067 = vmatpush1.bf16.msra.mxu0 %v1048
        %1068 = vmatprep.subr.bf16.mxu0 0
        %1069 = vmatpush1.bf16.msra.mxu0 %v1049
        %1070 = vmatprep.subr.bf16.mxu0 0
        %1071 = vmatpush1.bf16.msra.mxu0 %v1050
        %1072 = vmatprep.subr.bf16.mxu0 0
        %1073 = vmatpush1.bf16.msra.mxu0 %v1051
        %1074 = vmatprep.subr.bf16.mxu0 0
        %1075 = vmatpush1.bf16.msra.mxu0 %v1052
        %1076 = vmatprep.subr.bf16.mxu0 0
        %1077 = vmatpush1.bf16.msra.mxu0 %v1053
        %1078 = vmatprep.subr.bf16.mxu0 0
        %1079 = vmatpush1.bf16.msra.mxu0 0
        %1080 = vmatprep.subr.bf16.mxu0 0
        %1081 = vmatpush1.bf16.msra.mxu0 0
        %1082 = vmatprep.subr.bf16.mxu0 0
        %1083 = vmatpush1.bf16.msra.mxu0 0
        %1084 = vmatprep.subr.bf16.mxu0 0
        %1085 = vmatpush1.bf16.msra.mxu0 0
        %1086 = vmatprep.subr.bf16.mxu0 0
        %1087 = vmatpush1.bf16.msra.mxu0 0
        %1088 = vmatprep.subr.bf16.mxu0 0
        %1089 = vmatpush1.bf16.msra.mxu0 0
        %1090 = vmatprep.subr.bf16.mxu0 0
        %1091 = vmatpush1.bf16.msra.mxu0 0
        %1092 = vmatprep.subr.bf16.mxu0 0
        %1093 = vmatpush1.bf16.msra.mxu0 0
        %1094 = vmatprep.mubr.bf16.mxu0 0
        %1095 = vmatmul.mubr.bf16.gmra.mrb[0].mxu0 %v997
        %v1096 = vpop.f32.mrb[0].mxu0
        %v1097 = vadd.f32 0.0, %v1096
        %v1098 = vpop.f32.mrb[0].mxu0
        %v1099 = vpop.f32.mrb[0].mxu0
        %v1100 = vpop.f32.mrb[0].mxu0
        %1101 = vdwg.mxu0
        %v1102 = vadd.f32 %v484, %v1097
        %v1103 = vmul.f32 %v1102, %v1102
        %1104 = vadd.xlane.f32.xlu0 %v1103
        %v1105 = vpop.xlane.xlu0 %1104
        %v1106 = vmul.f32 %v1105, %v488
        %v1107 = vadd.f32 %v1106, 1e-06
        %v1108 = vrsqrt.pop %v1107
        %v1109 = vmul.f32 %v1102, %v1108
        %v1110 = vpack.c.bf16 %v1109, %v1109
        %v1111 = vld [vmem:[%s402] sm:$0xff]
        %v1112 = vld [vmem:[%s402 + $0x8] sm:$0xff]
        %v1113 = vld [vmem:[%s402 + $0x10] sm:$0xff]
        %v1114 = vld [vmem:[%s402 + $0x18] sm:$0xff]
        %v1115 = vld [vmem:[%s402 + $0x20] sm:$0xff]
        %v1116 = vld [vmem:[%s402 + $0x28] sm:$0xff]
        %v1117 = vld [vmem:[%s402 + $0x30] sm:$0xff]
        %v1118 = vld [vmem:[%s402 + $0x38] sm:$0xff]
        %v1119 = vld [vmem:[%s402 + $0x40] sm:$0xff]
        %v1120 = vld [vmem:[%s402 + $0x48] sm:$0xff]
        %v1121 = vld [vmem:[%s402 + $0x50] sm:$0xff]
        %v1122 = vld [vmem:[%s402 + $0x58] sm:$0xff]
        %v1123 = vld [vmem:[%s402 + $0x60] sm:$0xff]
        %v1124 = vld [vmem:[%s402 + $0x68] sm:$0xff]
        %v1125 = vld [vmem:[%s402 + $0x70] sm:$0xff]
        %v1126 = vld [vmem:[%s402 + $0x78] sm:$0xff]
        %v1127 = vld [vmem:[%s402 + $0x80] sm:$0xff]
        %v1128 = vld [vmem:[%s402 + $0x88] sm:$0xff]
        %v1129 = vld [vmem:[%s402 + $0x90] sm:$0xff]
        %v1130 = vld [vmem:[%s402 + $0x98] sm:$0xff]
        %v1131 = vld [vmem:[%s402 + $0xa0] sm:$0xff]
        %v1132 = vld [vmem:[%s402 + $0xa8] sm:$0xff]
        %v1133 = vld [vmem:[%s402 + $0xb0] sm:$0xff]
        %v1134 = vld [vmem:[%s402 + $0xb8] sm:$0xff]
        %v1135 = vld [vmem:[%s402 + $0xc0] sm:$0xff]
        %v1136 = vld [vmem:[%s402 + $0xc8] sm:$0xff]
        %v1137 = vld [vmem:[%s402 + $0xd0] sm:$0xff]
        %v1138 = vld [vmem:[%s402 + $0xd8] sm:$0xff]
        %v1139 = vld [vmem:[%s402 + $0xe0] sm:$0xff]
        %v1140 = vld [vmem:[%s402 + $0xe8] sm:$0xff]
        %v1141 = vld [vmem:[%s402 + $0xf0] sm:$0xff]
        %v1142 = vld [vmem:[%s402 + $0xf8] sm:$0xff]
        %v1175 = vunpack.c.l.b16 %v1111
        %v1176 = vunpack.c.h.b16 %v1111
        %v1177 = vunpack.c.l.b16 %v1112
        %v1178 = vunpack.c.h.b16 %v1112
        %v1179 = vunpack.c.l.b16 %v1113
        %v1180 = vunpack.c.h.b16 %v1113
        %v1181 = vunpack.c.l.b16 %v1114
        %v1182 = vunpack.c.h.b16 %v1114
        %v1183 = vunpack.c.l.b16 %v1115
        %v1184 = vunpack.c.h.b16 %v1115
        %v1185 = vunpack.c.l.b16 %v1116
        %v1186 = vunpack.c.h.b16 %v1116
        %v1187 = vunpack.c.l.b16 %v1117
        %v1188 = vunpack.c.h.b16 %v1117
        %v1189 = vunpack.c.l.b16 %v1118
        %v1190 = vunpack.c.h.b16 %v1118
        %v1191 = vunpack.c.l.b16 %v1119
        %v1192 = vunpack.c.h.b16 %v1119
        %v1193 = vunpack.c.l.b16 %v1120
        %v1194 = vunpack.c.h.b16 %v1120
        %v1195 = vunpack.c.l.b16 %v1121
        %v1196 = vunpack.c.h.b16 %v1121
        %v1197 = vunpack.c.l.b16 %v1122
        %v1198 = vunpack.c.h.b16 %v1122
        %v1199 = vunpack.c.l.b16 %v1123
        %v1200 = vunpack.c.h.b16 %v1123
        %v1201 = vunpack.c.l.b16 %v1124
        %v1202 = vunpack.c.h.b16 %v1124
        %v1203 = vunpack.c.l.b16 %v1125
        %v1204 = vunpack.c.h.b16 %v1125
        %v1205 = vunpack.c.l.b16 %v1126
        %v1206 = vunpack.c.h.b16 %v1126
        %v1207 = vunpack.c.l.b16 %v1127
        %v1208 = vunpack.c.h.b16 %v1127
        %v1209 = vunpack.c.l.b16 %v1128
        %v1210 = vunpack.c.h.b16 %v1128
        %v1211 = vunpack.c.l.b16 %v1129
        %v1212 = vunpack.c.h.b16 %v1129
        %v1213 = vunpack.c.l.b16 %v1130
        %v1214 = vunpack.c.h.b16 %v1130
        %v1215 = vunpack.c.l.b16 %v1131
        %v1216 = vunpack.c.h.b16 %v1131
        %v1217 = vunpack.c.l.b16 %v1132
        %v1218 = vunpack.c.h.b16 %v1132
        %v1219 = vunpack.c.l.b16 %v1133
        %v1220 = vunpack.c.h.b16 %v1133
        %v1221 = vunpack.c.l.b16 %v1134
        %v1222 = vunpack.c.h.b16 %v1134
        %v1223 = vunpack.c.l.b16 %v1135
        %v1224 = vunpack.c.h.b16 %v1135
        %v1225 = vunpack.c.l.b16 %v1136
        %v1226 = vunpack.c.h.b16 %v1136
        %v1227 = vunpack.c.l.b16 %v1137
        %v1228 = vunpack.c.h.b16 %v1137
        %v1229 = vunpack.c.l.b16 %v1138
        %v1230 = vunpack.c.h.b16 %v1138
        %v1231 = vunpack.c.l.b16 %v1139
        %v1232 = vunpack.c.h.b16 %v1139
        %v1233 = vunpack.c.l.b16 %v1140
        %v1234 = vunpack.c.h.b16 %v1140
        %v1235 = vunpack.c.l.b16 %v1141
        %v1236 = vunpack.c.h.b16 %v1141
        %v1237 = vunpack.c.l.b16 %v1142
        %v1238 = vunpack.c.h.b16 %v1142
        %v1239 = vpack.c.b16 %v1179, %v1175
        %v1240 = vpack.c.b16 %v1180, %v1176
        %v1241 = vpack.c.b16 %v1181, %v1177
        %v1242 = vpack.c.b16 %v1182, %v1178
        %v1243 = vpack.c.b16 %v1187, %v1183
        %v1244 = vpack.c.b16 %v1188, %v1184
        %v1245 = vpack.c.b16 %v1189, %v1185
        %v1246 = vpack.c.b16 %v1190, %v1186
        %v1247 = vpack.c.b16 %v1195, %v1191
        %v1248 = vpack.c.b16 %v1196, %v1192
        %v1249 = vpack.c.b16 %v1197, %v1193
        %v1250 = vpack.c.b16 %v1198, %v1194
        %v1251 = vpack.c.b16 %v1203, %v1199
        %v1252 = vpack.c.b16 %v1204, %v1200
        %v1253 = vpack.c.b16 %v1205, %v1201
        %v1254 = vpack.c.b16 %v1206, %v1202
        %v1255 = vpack.c.b16 %v1211, %v1207
        %v1256 = vpack.c.b16 %v1212, %v1208
        %v1257 = vpack.c.b16 %v1213, %v1209
        %v1258 = vpack.c.b16 %v1214, %v1210
        %v1259 = vpack.c.b16 %v1219, %v1215
        %v1260 = vpack.c.b16 %v1220, %v1216
        %v1261 = vpack.c.b16 %v1221, %v1217
        %v1262 = vpack.c.b16 %v1222, %v1218
        %v1263 = vpack.c.b16 %v1227, %v1223
        %v1264 = vpack.c.b16 %v1228, %v1224
        %v1265 = vpack.c.b16 %v1229, %v1225
        %v1266 = vpack.c.b16 %v1230, %v1226
        %v1267 = vpack.c.b16 %v1235, %v1231
        %v1268 = vpack.c.b16 %v1236, %v1232
        %v1269 = vpack.c.b16 %v1237, %v1233
        %v1270 = vpack.c.b16 %v1238, %v1234
        %1303 = vmatprep.subr.bf16.mxu0 %v1240
        %1304 = vmatpush1.bf16.msra.mxu0 %v1239
        %1305 = vmatprep.subr.bf16.mxu0 %v1244
        %1306 = vmatpush1.bf16.msra.mxu0 %v1243
        %1307 = vmatprep.subr.bf16.mxu0 %v1248
        %1308 = vmatpush1.bf16.msra.mxu0 %v1247
        %1309 = vmatprep.subr.bf16.mxu0 %v1252
        %1310 = vmatpush1.bf16.msra.mxu0 %v1251
        %1311 = vmatprep.subr.bf16.mxu0 %v1256
        %1312 = vmatpush1.bf16.msra.mxu0 %v1255
        %1313 = vmatprep.subr.bf16.mxu0 %v1260
        %1314 = vmatpush1.bf16.msra.mxu0 %v1259
        %1315 = vmatprep.subr.bf16.mxu0 %v1264
        %1316 = vmatpush1.bf16.msra.mxu0 %v1263
        %1317 = vmatprep.subr.bf16.mxu0 %v1268
        %1318 = vmatpush1.bf16.msra.mxu0 %v1267
        %1319 = vmatprep.subr.bf16.mxu0 0
        %1320 = vmatpush1.bf16.msra.mxu0 0
        %1321 = vmatprep.subr.bf16.mxu0 0
        %1322 = vmatpush1.bf16.msra.mxu0 0
        %1323 = vmatprep.subr.bf16.mxu0 0
        %1324 = vmatpush1.bf16.msra.mxu0 0
        %1325 = vmatprep.subr.bf16.mxu0 0
        %1326 = vmatpush1.bf16.msra.mxu0 0
        %1327 = vmatprep.subr.bf16.mxu0 0
        %1328 = vmatpush1.bf16.msra.mxu0 0
        %1329 = vmatprep.subr.bf16.mxu0 0
        %1330 = vmatpush1.bf16.msra.mxu0 0
        %1331 = vmatprep.subr.bf16.mxu0 0
        %1332 = vmatpush1.bf16.msra.mxu0 0
        %1333 = vmatprep.subr.bf16.mxu0 0
        %1334 = vmatpush1.bf16.msra.mxu0 0
        %1335 = vmatprep.mubr.bf16.mxu0 0
        %1336 = vmatmul.mubr.bf16.gmra.mrb[0].mxu0 %v1110
        %v1337 = vpop.f32.mrb[0].mxu0
        %v1338 = vadd.f32 0.0, %v1337
        %v1339 = vpop.f32.mrb[0].mxu0
        %v1340 = vadd.f32 0.0, %v1339
        %v1341 = vpop.f32.mrb[0].mxu0
        %v1342 = vpop.f32.mrb[0].mxu0
        %1343 = vdwg.mxu0
        %1344 = vmatprep.subr.bf16.mxu0 %v1242
        %1345 = vmatpush1.bf16.msra.mxu0 %v1241
        %1346 = vmatprep.subr.bf16.mxu0 %v1246
        %1347 = vmatpush1.bf16.msra.mxu0 %v1245
        %1348 = vmatprep.subr.bf16.mxu0 %v1250
        %1349 = vmatpush1.bf16.msra.mxu0 %v1249
        %1350 = vmatprep.subr.bf16.mxu0 %v1254
        %1351 = vmatpush1.bf16.msra.mxu0 %v1253
        %1352 = vmatprep.subr.bf16.mxu0 %v1258
        %1353 = vmatpush1.bf16.msra.mxu0 %v1257
        %1354 = vmatprep.subr.bf16.mxu0 %v1262
        %1355 = vmatpush1.bf16.msra.mxu0 %v1261
        %1356 = vmatprep.subr.bf16.mxu0 %v1266
        %1357 = vmatpush1.bf16.msra.mxu0 %v1265
        %1358 = vmatprep.subr.bf16.mxu0 %v1270
        %1359 = vmatpush1.bf16.msra.mxu0 %v1269
        %1360 = vmatprep.subr.bf16.mxu0 0
        %1361 = vmatpush1.bf16.msra.mxu0 0
        %1362 = vmatprep.subr.bf16.mxu0 0
        %1363 = vmatpush1.bf16.msra.mxu0 0
        %1364 = vmatprep.subr.bf16.mxu0 0
        %1365 = vmatpush1.bf16.msra.mxu0 0
        %1366 = vmatprep.subr.bf16.mxu0 0
        %1367 = vmatpush1.bf16.msra.mxu0 0
        %1368 = vmatprep.subr.bf16.mxu0 0
        %1369 = vmatpush1.bf16.msra.mxu0 0
        %1370 = vmatprep.subr.bf16.mxu0 0
        %1371 = vmatpush1.bf16.msra.mxu0 0
        %1372 = vmatprep.subr.bf16.mxu0 0
        %1373 = vmatpush1.bf16.msra.mxu0 0
        %1374 = vmatprep.subr.bf16.mxu0 0
        %1375 = vmatpush1.bf16.msra.mxu0 0
        %1376 = vmatprep.mubr.bf16.mxu0 0
        %1377 = vmatmul.mubr.bf16.gmra.mrb[0].mxu0 %v1110
        %v1378 = vpop.f32.mrb[0].mxu0
        %v1379 = vadd.f32 0.0, %v1378
        %v1380 = vpop.f32.mrb[0].mxu0
        %v1381 = vadd.f32 0.0, %v1380
        %v1382 = vpop.f32.mrb[0].mxu0
        %v1383 = vpop.f32.mrb[0].mxu0
        %1384 = vdwg.mxu0
        %v1385 = vxor.u32 %v1338, 2147483648
        %v1386 = vxor.u32 %v1340, 2147483648
        %v1387 = vmul.f32 %v1385, 1.442695
        %v1388 = vpow.pop %v1387
        %v1389 = vmul.f32 %v1386, 1.442695
        %v1390 = vpow.pop %v1389
        %v1391 = vadd.f32 %v1388, 1.0
        %v1392 = vadd.f32 %v1390, 1.0
        %v1393 = vrcp.pop %v1391
        %v1394 = vmul.f32 1.0, %v1393
        %v1395 = vrcp.pop %v1392
        %v1396 = vmul.f32 1.0, %v1395
        %v1397 = vmul.f32 %v1338, %v1394
        %v1398 = vmul.f32 %v1340, %v1396
        %v1399 = vmul.f32 %v1397, %v1379
        %v1400 = vmul.f32 %v1398, %v1381
        %v1401 = vpack.c.bf16 %v1399, %v1399
        %v1402 = vpack.c.bf16 %v1400, %v1400
        %v1403 = vld [vmem:[%s411] sm:$0xf]
        %v1404 = vld [vmem:[%s411 + $0x4] sm:$0xf]
        %v1405 = vld [vmem:[%s411 + $0x8] sm:$0xf]
        %v1406 = vld [vmem:[%s411 + $0xc] sm:$0xf]
        %v1407 = vld [vmem:[%s411 + $0x10] sm:$0xf]
        %v1408 = vld [vmem:[%s411 + $0x14] sm:$0xf]
        %v1409 = vld [vmem:[%s411 + $0x18] sm:$0xf]
        %v1410 = vld [vmem:[%s411 + $0x1c] sm:$0xf]
        %v1411 = vld [vmem:[%s411 + $0x20] sm:$0xf]
        %v1412 = vld [vmem:[%s411 + $0x24] sm:$0xf]
        %v1413 = vld [vmem:[%s411 + $0x28] sm:$0xf]
        %v1414 = vld [vmem:[%s411 + $0x2c] sm:$0xf]
        %v1415 = vld [vmem:[%s411 + $0x30] sm:$0xf]
        %v1416 = vld [vmem:[%s411 + $0x34] sm:$0xf]
        %v1417 = vld [vmem:[%s411 + $0x38] sm:$0xf]
        %v1418 = vld [vmem:[%s411 + $0x3c] sm:$0xf]
        %v1419 = vld [vmem:[%s411 + $0x40] sm:$0xf]
        %v1420 = vld [vmem:[%s411 + $0x44] sm:$0xf]
        %v1421 = vld [vmem:[%s411 + $0x48] sm:$0xf]
        %v1422 = vld [vmem:[%s411 + $0x4c] sm:$0xf]
        %v1423 = vld [vmem:[%s411 + $0x50] sm:$0xf]
        %v1424 = vld [vmem:[%s411 + $0x54] sm:$0xf]
        %v1425 = vld [vmem:[%s411 + $0x58] sm:$0xf]
        %v1426 = vld [vmem:[%s411 + $0x5c] sm:$0xf]
        %v1427 = vld [vmem:[%s411 + $0x60] sm:$0xf]
        %v1428 = vld [vmem:[%s411 + $0x64] sm:$0xf]
        %v1429 = vld [vmem:[%s411 + $0x68] sm:$0xf]
        %v1430 = vld [vmem:[%s411 + $0x6c] sm:$0xf]
        %v1431 = vld [vmem:[%s411 + $0x70] sm:$0xf]
        %v1432 = vld [vmem:[%s411 + $0x74] sm:$0xf]
        %v1433 = vld [vmem:[%s411 + $0x78] sm:$0xf]
        %v1434 = vld [vmem:[%s411 + $0x7c] sm:$0xf]
        %v1467 = vunpack.c.l.b16 %v1403
        %v1468 = vunpack.c.l.b16 %v1404
        %v1469 = vunpack.c.l.b16 %v1405
        %v1470 = vunpack.c.l.b16 %v1406
        %v1471 = vunpack.c.l.b16 %v1407
        %v1472 = vunpack.c.l.b16 %v1408
        %v1473 = vunpack.c.l.b16 %v1409
        %v1474 = vunpack.c.l.b16 %v1410
        %v1475 = vunpack.c.l.b16 %v1411
        %v1476 = vunpack.c.l.b16 %v1412
        %v1477 = vunpack.c.l.b16 %v1413
        %v1478 = vunpack.c.l.b16 %v1414
        %v1479 = vunpack.c.l.b16 %v1415
        %v1480 = vunpack.c.l.b16 %v1416
        %v1481 = vunpack.c.l.b16 %v1417
        %v1482 = vunpack.c.l.b16 %v1418
        %v1483 = vunpack.c.l.b16 %v1419
        %v1484 = vunpack.c.l.b16 %v1420
        %v1485 = vunpack.c.l.b16 %v1421
        %v1486 = vunpack.c.l.b16 %v1422
        %v1487 = vunpack.c.l.b16 %v1423
        %v1488 = vunpack.c.l.b16 %v1424
        %v1489 = vunpack.c.l.b16 %v1425
        %v1490 = vunpack.c.l.b16 %v1426
        %v1491 = vunpack.c.l.b16 %v1427
        %v1492 = vunpack.c.l.b16 %v1428
        %v1493 = vunpack.c.l.b16 %v1429
        %v1494 = vunpack.c.l.b16 %v1430
        %v1495 = vunpack.c.l.b16 %v1431
        %v1496 = vunpack.c.l.b16 %v1432
        %v1497 = vunpack.c.l.b16 %v1433
        %v1498 = vunpack.c.l.b16 %v1434
        %v1499 = vpack.c.b16 %v1468, %v1467
        %v1500 = vpack.c.b16 %v1470, %v1469
        %v1501 = vpack.c.b16 %v1472, %v1471
        %v1502 = vpack.c.b16 %v1474, %v1473
        %v1503 = vpack.c.b16 %v1476, %v1475
        %v1504 = vpack.c.b16 %v1478, %v1477
        %v1505 = vpack.c.b16 %v1480, %v1479
        %v1506 = vpack.c.b16 %v1482, %v1481
        %v1507 = vpack.c.b16 %v1484, %v1483
        %v1508 = vpack.c.b16 %v1486, %v1485
        %v1509 = vpack.c.b16 %v1488, %v1487
        %v1510 = vpack.c.b16 %v1490, %v1489
        %v1511 = vpack.c.b16 %v1492, %v1491
        %v1512 = vpack.c.b16 %v1494, %v1493
        %v1513 = vpack.c.b16 %v1496, %v1495
        %v1514 = vpack.c.b16 %v1498, %v1497
        %1531 = vmatprep.subr.bf16.mxu0 0
        %1532 = vmatpush1.bf16.msra.mxu0 %v1499
        %1533 = vmatprep.subr.bf16.mxu0 0
        %1534 = vmatpush1.bf16.msra.mxu0 %v1500
        %1535 = vmatprep.subr.bf16.mxu0 0
        %1536 = vmatpush1.bf16.msra.mxu0 %v1501
        %1537 = vmatprep.subr.bf16.mxu0 0
        %1538 = vmatpush1.bf16.msra.mxu0 %v1502
        %1539 = vmatprep.subr.bf16.mxu0 0
        %1540 = vmatpush1.bf16.msra.mxu0 %v1503
        %1541 = vmatprep.subr.bf16.mxu0 0
        %1542 = vmatpush1.bf16.msra.mxu0 %v1504
        %1543 = vmatprep.subr.bf16.mxu0 0
        %1544 = vmatpush1.bf16.msra.mxu0 %v1505
        %1545 = vmatprep.subr.bf16.mxu0 0
        %1546 = vmatpush1.bf16.msra.mxu0 %v1506
        %1547 = vmatprep.subr.bf16.mxu0 0
        %1548 = vmatpush1.bf16.msra.mxu0 %v1507
        %1549 = vmatprep.subr.bf16.mxu0 0
        %1550 = vmatpush1.bf16.msra.mxu0 %v1508
        %1551 = vmatprep.subr.bf16.mxu0 0
        %1552 = vmatpush1.bf16.msra.mxu0 %v1509
        %1553 = vmatprep.subr.bf16.mxu0 0
        %1554 = vmatpush1.bf16.msra.mxu0 %v1510
        %1555 = vmatprep.subr.bf16.mxu0 0
        %1556 = vmatpush1.bf16.msra.mxu0 %v1511
        %1557 = vmatprep.subr.bf16.mxu0 0
        %1558 = vmatpush1.bf16.msra.mxu0 %v1512
        %1559 = vmatprep.subr.bf16.mxu0 0
        %1560 = vmatpush1.bf16.msra.mxu0 %v1513
        %1561 = vmatprep.subr.bf16.mxu0 0
        %1562 = vmatpush1.bf16.msra.mxu0 %v1514
        %1563 = vmatprep.mubr.bf16.mxu0 %v1402
        %1564 = vmatmul.mubr.bf16.gmra.mrb[0].mxu0 %v1401
        %v1565 = vpop.f32.mrb[0].mxu0
        %v1566 = vadd.f32 0.0, %v1565
        %v1567 = vpop.f32.mrb[0].mxu0
        %v1568 = vpop.f32.mrb[0].mxu0
        %v1569 = vpop.f32.mrb[0].mxu0
        %1570 = vdwg.mxu0
        %v1571 = vadd.f32 %v1102, %v1566
        %p1572 = scmp.lt.s32.totalorder %s31, 1
        // Predicated region
        $region73: #{deepseek_decoder_last_hidden_state.1} parent=55 // pred_check
          %p1573 = pneg %p1572
        $region74: #{deepseek_decoder_last_hidden_state.1} parent=55 // pred_check_branch
          %1575 = sbr.rel (%p1573) target = $region76
        $region75: #{deepseek_decoder_last_hidden_state.1} parent=55 // pred_region
          %1576 = vst [vmem:[%s476] sm:$0xff] %v1571
        $region76: #{deepseek_decoder_last_hidden_state.1} parent=55 // pred_fallthru
          _
        %p1577 = scmp.eq.s32.totalorder %s31, 1
        // Predicated region
        $region77: #{deepseek_decoder_last_hidden_state.1} parent=55 // pred_check
          %p1578 = pneg %p1577
        $region78: #{deepseek_decoder_last_hidden_state.1} parent=55 // pred_check_branch
          %1580 = sbr.rel (%p1578) target = $region80
        $region79: #{deepseek_decoder_last_hidden_state.1} parent=55 // pred_region
          %v1581 = vmul.f32 %v1571, %v1571
          %1582 = vadd.xlane.f32.xlu0 %v1581
          %v1583 = vpop.xlane.xlu0 %1582
          %v1584 = vmul.f32 %v1583, %v488
          %v1585 = vadd.f32 %v1584, 1e-06
          %v1586 = vrsqrt.pop %v1585
          %v1587 = vmul.f32 %v1571, %v1586
          %v1588 = vld [vmem:[%s8] sm:$0x1]
          %v1590 = vlaneseq
          %v1591 = vshrl.u32 %v1590, 7
          %v1592 = vsub.s32 0, %v1591
          %v1593 = vrot.slane %v1588, %v1592
          %v1595 = vmul.f32 %v1587, %v1593
          %1596 = vst [vmem:[%s476] sm:$0xff] %v1595
        $region80: #{deepseek_decoder_last_hidden_state.1} parent=55 // pred_fallthru
          _
        %p1597 = scmp.lt.s32.totalorder %s30, 1
        %s1598 = scalar_select %p1597, %s30, 1
        %s1599 = smul.addr %s1598, 8
        %s1600 = scalar_lea.vmem %s9, %s1599
        // Predicated region
        $region81: #{deepseek_decoder_last_hidden_state.1} parent=55 // pred_check
          %p1601 = pneg %p270
        $region82: #{deepseek_decoder_last_hidden_state.1} parent=55 // pred_check_branch
          %1603 = sbr.rel (%p1601) target = $region84
        $region83: #{deepseek_decoder_last_hidden_state.1} parent=55 // pred_region
          _
        $region84: #{deepseek_decoder_last_hidden_state.1} parent=55 // pred_fallthru
          _
      $region56: #{deepseek_decoder_last_hidden_state.1} parent=5 // pred_fallthru
        _
      %p1604 = scmp.le.s32.totalorder 2, %s21
      // Predicated region
      $region85: #{deepseek_decoder_last_hidden_state.1} parent=5 // pred_check
        %p1605 = pneg %p1604
      $region86: #{deepseek_decoder_last_hidden_state.1} parent=5 // pred_check_branch
        %1607 = sbr.rel (%p1605) target = $region88
      $region87: #{deepseek_decoder_last_hidden_state.1} parent=5 // pred_region
        %s1608 = ssub.s32 %s21, 2
        // Predicated region
        $region89: #{deepseek_decoder_last_hidden_state.1} parent=87 // pred_check
          %p1609 = pneg %p276
        $region90: #{deepseek_decoder_last_hidden_state.1} parent=87 // pred_check_branch
          %1611 = sbr.rel (%p1609) target = $region92
        $region91: #{deepseek_decoder_last_hidden_state.1} parent=87 // pred_region
          %p1612 = scmp.lt.s32.totalorder %s32, 1
          %s1613 = scalar_select %p1612, %s32, 1
          %s1614 = smul.addr %s1613, 8
          %s1615 = scalar_lea.vmem %s9, %s1614
        $region92: #{deepseek_decoder_last_hidden_state.1} parent=87 // pred_fallthru
          _
      $region88: #{deepseek_decoder_last_hidden_state.1} parent=5 // pred_fallthru
        _
    $region6: #{deepseek_decoder_last_hidden_state.1} parent=1 // loop_footer
      %s25 = sadd.s32 1, %s21
    $region7: #{deepseek_decoder_last_hidden_state.1} parent=1 // loop_footer_branch
      %20 = sbr.rel target = $region3
    $region8: #{deepseek_decoder_last_hidden_state.1} parent=1 // loop_exit
      _
    %1616 = vsyncpa [#allocation4], 1
    %s1617 = scalar_lea.sflag [#allocation4], 1
    %1618 = vsyncpa %s1617, 1
    %1619 = vsyncpa [#allocation6], 1
    %s1620 = scalar_lea.sflag [#allocation6], 1
    %1621 = vsyncpa %s1620, 1

</llo_original>
